<compile_context>
chip_gen: v5e
topology: v5e:2x2
jax: 0.10.0
libtpu: 0.0.40
codegen_flags: <defaults>
</compile_context>

<pallas_src>
import functools

import numpy as np
import jax
import jax.numpy as jnp
from jax.experimental import pallas as pl
from jax.experimental.pallas import tpu as pltpu


# ---------------------------------------------------------------------------
# Fused forward kernel: one grid step processes a block of `bb` images.
# All matmuls are block-batched 2-D MXU dots; pooling is lane-wise max.
# ---------------------------------------------------------------------------
def _net_kernel(x_ref, w1b_ref, b1_ref, w2b_ref, b2_ref, w3p_ref, b3_ref,
                w4p_ref, b4_ref, o_ref):
    f32 = jnp.float32
    bb = x_ref.shape[0]

    # ---- conv1: ONE banded MXU matmul for the whole block -----------------
    # x_ref is the wrapper-prepared layout (bb, 18, 56):
    #   row rp = raw-row pair, lane = parity*28 + iw  (rows 14..17 are zero pad)
    # LHS row (b, j) holds raw image rows 2j .. 2j+5 (K = d*28 + iw, d=0..5).
    xv = x_ref[...]                                                # (bb, 18, 56)
    lhs1 = jnp.concatenate(
        [xv[:, 0:16, :], xv[:, 1:17, :], xv[:, 2:18, :]], axis=2)  # (bb, 16, 168)
    lhs1 = lhs1.reshape(bb * 16, 168)
    y1 = jnp.dot(lhs1, w1b_ref[...], preferred_element_type=f32) + b1_ref[...]
    # y1: (bb*16, 480); rows (b, pooled-row j<=11 valid), lanes hpair*240+ow*10+co

    # ---- 2x2 max-pool + relu, entirely lane-wise ---------------------------
    t = jnp.maximum(y1[:, 0:240], y1[:, 240:480])        # max over row pair
    t = jnp.maximum(t[:, 0:230], t[:, 10:240])           # max over width pair
    p1 = jnp.maximum(t, 0.0).reshape(bb, 16, 230)
    # valid pooled value (j, pw, ci) at lane 20*pw + ci; stale lanes are
    # ignored via zero rows in w2b.

    # ---- conv2: 5 banded matmuls, batched over the block -------------------
    # TODO(synk): Dropout2d on the conv2 output is identity (eval mode only).
    acc2 = jnp.dot(p1[:, 0:8, :].reshape(bb * 8, 230), w2b_ref[0],
                   preferred_element_type=f32)
    for ki in range(1, 5):
        acc2 = acc2 + jnp.dot(p1[:, ki:ki + 8, :].reshape(bb * 8, 230),
                              w2b_ref[ki], preferred_element_type=f32)
    y2 = acc2 + b2_ref[...]                               # (bb*8, 160)

    # ---- 2x2 max-pool + relu; flatten folded into fc1 ----------------------
    y2m = jnp.maximum(y2[:, 0:140], y2[:, 20:160]).reshape(bb, 8, 140)
    h = None
    for ph2 in range(4):
        g = jnp.maximum(
            jnp.maximum(y2m[:, 2 * ph2, :], y2m[:, 2 * ph2 + 1, :]), 0.0)
        d = jnp.dot(g, w3p_ref[ph2], preferred_element_type=f32)
        h = d if h is None else h + d
    h = jnp.maximum(h + b3_ref[...], 0.0)                 # (bb, 128), cols>=50 are 0
    # TODO(synk): torch.dropout(p=0.5, train=training) is identity (eval mode).

    # ---- fc2 + log_softmax --------------------------------------------------
    z = jnp.dot(h, w4p_ref[...], preferred_element_type=f32) + b4_ref[...]
    m = jnp.max(z, axis=-1, keepdims=True)
    lse = m + jnp.log(jnp.sum(jnp.exp(z - m), axis=-1, keepdims=True))
    o_ref[...] = z - lse


# ---------------------------------------------------------------------------
# Parameter init (PyTorch layouts) and one-time kernel-layout preparation
# ---------------------------------------------------------------------------
def init_params(key):
    ks = jax.random.split(key, 8)

    def u(k, shape, fan_in):
        bound = 1.0 / jnp.sqrt(jnp.float32(fan_in))
        return jax.random.uniform(k, shape, jnp.float32, -bound, bound)

    return {
        "conv1_w": u(ks[0], (10, 1, 5, 5), 1 * 25),   # (Cout, Cin, kh, kw)
        "conv1_b": u(ks[1], (10,), 1 * 25),
        "conv2_w": u(ks[2], (20, 10, 5, 5), 10 * 25),
        "conv2_b": u(ks[3], (20,), 10 * 25),
        "fc1_w":   u(ks[4], (50, 320), 320),          # (out, in) like nn.Linear
        "fc1_b":   u(ks[5], (50,), 320),
        "fc2_w":   u(ks[6], (10, 50), 50),
        "fc2_b":   u(ks[7], (10,), 50),
    }


def prepare_params(p):
    """One-time host-side weight re-layout (outside jit)."""
    w1 = np.asarray(p["conv1_w"], np.float32)[:, 0]   # (10, 5, 5) [co, ki, kj]
    b1 = np.asarray(p["conv1_b"], np.float32)
    w2 = np.asarray(p["conv2_w"], np.float32)         # (20, 10, 5, 5)
    b2 = np.asarray(p["conv2_b"], np.float32)
    w3 = np.asarray(p["fc1_w"], np.float32)           # (50, 320)
    b3 = np.asarray(p["fc1_b"], np.float32)
    w4 = np.asarray(p["fc2_w"], np.float32)           # (10, 50)
    b4 = np.asarray(p["fc2_b"], np.float32)

    # conv1: LHS row (b, j) holds x raw rows 2j+d (d=0..5), K index = d*28+iw.
    # Output lane = hpair*240 + ow*10 + co (raw output row = 2j + hpair).
    w1b = np.zeros((168, 480), np.float32)
    for d in range(6):
        for iw in range(28):
            row = d * 28 + iw
            for hpair in range(2):
                ki = d - hpair
                if not (0 <= ki <= 4):
                    continue
                for ow in range(24):
                    kj = iw - ow
                    if 0 <= kj <= 4:
                        col = hpair * 240 + ow * 10
                        w1b[row, col:col + 10] = w1[:, ki, kj]
    b1t = np.tile(b1, 48).reshape(1, 480)

    # conv2: 5 banded (230,160) weights; pooled conv1 lanes 20*pw+ci valid,
    # other (stale) lanes get zero rows.  Output lane = ow2*20 + co.
    w2b = np.zeros((5, 230, 160), np.float32)
    for ki in range(5):
        for pw in range(12):
            for ow2 in range(8):
                kj = pw - ow2
                if 0 <= kj <= 4:
                    w2b[ki, 20 * pw:20 * pw + 10,
                        ow2 * 20:(ow2 + 1) * 20] = w2[:, :, ki, kj].T   # (ci, co)
    b2t = np.tile(b2, 8).reshape(1, 160)

    # fc1: 4 per-pooled-row (140,128) slices; pooled conv2 lanes 40*pw2+co
    # valid (others zero).  Folds PyTorch's NCHW view(-1,320) ordering
    # (flat = co*16 + ph2*4 + pw2) and pads the 50 outputs to 128 lanes.
    w3p = np.zeros((4, 140, 128), np.float32)
    for ph2 in range(4):
        for pw2 in range(4):
            for co in range(20):
                w3p[ph2, 40 * pw2 + co, :50] = w3[:, co * 16 + ph2 * 4 + pw2]
    b3t = np.zeros((1, 128), np.float32)
    b3t[0, :50] = b3

    w4p = np.zeros((128, 10), np.float32)
    w4p[:50, :] = w4.T
    b4t = b4.reshape(1, 10)

    host = dict(w1b=w1b, b1t=b1t, w2b=w2b, b2t=b2t,
                w3p=w3p, b3t=b3t, w4p=w4p, b4t=b4t)
    return {k: jnp.asarray(v) for k, v in host.items()}


# ---------------------------------------------------------------------------
# Forward wrapper: single fused pallas_call, grid over the batch
# ---------------------------------------------------------------------------
def net_forward(prep, x_nchw):
    B = x_nchw.shape[0]
    bb = B if B <= 32 else 32                 # images per grid step
    Bp = ((B + bb - 1) // bb) * bb

    # Row-pair-in-lanes layout: (B, 14, 56), lane = parity*28 + iw; pad 4 junk
    # row-pairs so the in-kernel banded slices stay in-bounds.
    xp = x_nchw.reshape(B, 14, 56)
    xp = jnp.pad(xp, ((0, Bp - B), (0, 4), (0, 0)))

    out = pl.pallas_call(
        _net_kernel,
        out_shape=jax.ShapeDtypeStruct((Bp, 10), jnp.float32),
        grid_spec=pltpu.PrefetchScalarGridSpec(
            num_scalar_prefetch=0,
            grid=(Bp // bb,),
            in_specs=[
                pl.BlockSpec((bb, 18, 56), lambda i: (i, 0, 0)),     # x
                pl.BlockSpec((168, 480), lambda i: (0, 0)),          # conv1 banded
                pl.BlockSpec((1, 480), lambda i: (0, 0)),
                pl.BlockSpec((5, 230, 160), lambda i: (0, 0, 0)),    # conv2 banded
                pl.BlockSpec((1, 160), lambda i: (0, 0)),
                pl.BlockSpec((4, 140, 128), lambda i: (0, 0, 0)),    # fc1 (padded)
                pl.BlockSpec((1, 128), lambda i: (0, 0)),
                pl.BlockSpec((128, 10), lambda i: (0, 0)),           # fc2
                pl.BlockSpec((1, 10), lambda i: (0, 0)),
            ],
            out_specs=pl.BlockSpec((bb, 10), lambda i: (i, 0)),
        ),
        compiler_params=pltpu.CompilerParams(
            dimension_semantics=("parallel",)),
    )(xp, prep["w1b"], prep["b1t"], prep["w2b"], prep["b2t"],
      prep["w3p"], prep["b3t"], prep["w4p"], prep["b4t"])
    return out[:B]


# ---------------------------------------------------------------------------
# Pure-JAX reference (numerical sanity check of the fused kernel)
# ---------------------------------------------------------------------------
def _reference_forward(params, x_nchw):
    hi = jax.lax.Precision.HIGHEST
    x = jnp.transpose(x_nchw, (0, 2, 3, 1))                        # NHWC

    def conv(x, w, b):  # w: (co, ci, kh, kw), valid, stride 1 (cross-corr)
        wr = jnp.transpose(w, (2, 3, 1, 0))                        # HWIO
        y = jax.lax.conv_general_dilated(
            x, wr, (1, 1), "VALID",
            dimension_numbers=("NHWC", "HWIO", "NHWC"), precision=hi)
        return y + b

    def pool_relu(y):
        B, H, W, C = y.shape
        y = y.reshape(B, H // 2, 2, W // 2, 2, C).max(axis=(2, 4))
        return jnp.maximum(y, 0.0)

    y = pool_relu(conv(x, params["conv1_w"], params["conv1_b"]))
    y = pool_relu(conv(y, params["conv2_w"], params["conv2_b"]))
    flat = jnp.transpose(y, (0, 3, 1, 2)).reshape(x.shape[0], 320)
    h = jnp.maximum(
        jnp.dot(flat, params["fc1_w"].T, precision=hi) + params["fc1_b"], 0.0)
    z = jnp.dot(h, params["fc2_w"].T, precision=hi) + params["fc2_b"]
    return jax.nn.log_softmax(z, axis=-1)


if __name__ == "__main__":
    key = jax.random.PRNGKey(0)
    pkey, xkey = jax.random.split(key)
    params = init_params(pkey)
    prep = prepare_params(params)             # weight re-layouts hoisted here

    # MNIST-shaped input, batch=2, NCHW
    x = jax.random.normal(xkey, (2, 1, 28, 28), jnp.float32)

    fwd = jax.jit(functools.partial(net_forward, prep))
    out = jax.block_until_ready(fwd(x))

    assert out.shape == (2, 10), out.shape
    # rows of log_softmax should sum (in prob space) to ~1
    assert jnp.allclose(jnp.sum(jnp.exp(out), axis=1), 1.0, atol=1e-4)
    # match the pure-JAX reference implementation
    ref = _reference_forward(params, x)
    assert jnp.allclose(out, ref, atol=2e-2, rtol=2e-2), (
        float(jnp.max(jnp.abs(out - ref))))
    print("KERNEL_OK")
</pallas_src>

<mosaic_0001>
module attributes {stable_mosaic.version = 11 : i64} {
  func.func @_net_kernel(%arg0: i32, %arg1: memref<2x18x56xf32, #tpu.memory_space<vmem>>, %arg2: memref<168x480xf32, #tpu.memory_space<vmem>>, %arg3: memref<1x480xf32, #tpu.memory_space<vmem>>, %arg4: memref<5x230x160xf32, #tpu.memory_space<vmem>>, %arg5: memref<1x160xf32, #tpu.memory_space<vmem>>, %arg6: memref<4x140x128xf32, #tpu.memory_space<vmem>>, %arg7: memref<1x128xf32, #tpu.memory_space<vmem>>, %arg8: memref<128x10xf32, #tpu.memory_space<vmem>>, %arg9: memref<1x10xf32, #tpu.memory_space<vmem>>, %arg10: memref<2x10xf32, #tpu.memory_space<vmem>>) attributes {dimension_semantics = [#tpu.dimension_semantics<parallel>], iteration_bounds = array<i64: 1>, scalar_prefetch = 0 : i64, scratch_operands = 0 : i64, tpu.core_type = #tpu.core_type<tc>, window_params = [{transform_indices = @transform_0, window_bounds = array<i64: 2, 18, 56>}, {pipeline_mode = #tpu.pipeline_mode<synchronous>, transform_indices = @transform_1, window_bounds = array<i64: 168, 480>}, {pipeline_mode = #tpu.pipeline_mode<synchronous>, transform_indices = @transform_2, window_bounds = array<i64: 1, 480>}, {pipeline_mode = #tpu.pipeline_mode<synchronous>, transform_indices = @transform_3, window_bounds = array<i64: 5, 230, 160>}, {pipeline_mode = #tpu.pipeline_mode<synchronous>, transform_indices = @transform_4, window_bounds = array<i64: 1, 160>}, {pipeline_mode = #tpu.pipeline_mode<synchronous>, transform_indices = @transform_5, window_bounds = array<i64: 4, 140, 128>}, {pipeline_mode = #tpu.pipeline_mode<synchronous>, transform_indices = @transform_6, window_bounds = array<i64: 1, 128>}, {pipeline_mode = #tpu.pipeline_mode<synchronous>, transform_indices = @transform_7, window_bounds = array<i64: 128, 10>}, {pipeline_mode = #tpu.pipeline_mode<synchronous>, transform_indices = @transform_8, window_bounds = array<i64: 1, 10>}, {transform_indices = @transform_9, window_bounds = array<i64: 2, 10>}]} {
    %c0 = arith.constant 0 : index
    %c0_0 = arith.constant 0 : index
    %c0_1 = arith.constant 0 : index
    %0 = vector.load %arg1[%c0, %c0_0, %c0_1] : memref<2x18x56xf32, #tpu.memory_space<vmem>>, vector<2x18x56xf32>
    %1 = vector.extract_strided_slice %0 {offsets = [0, 0, 0], sizes = [2, 16, 56], strides = [1, 1, 1]} : vector<2x18x56xf32> to vector<2x16x56xf32>
    %2 = vector.extract_strided_slice %0 {offsets = [0, 1, 0], sizes = [2, 16, 56], strides = [1, 1, 1]} : vector<2x18x56xf32> to vector<2x16x56xf32>
    %3 = vector.extract_strided_slice %0 {offsets = [0, 2, 0], sizes = [2, 16, 56], strides = [1, 1, 1]} : vector<2x18x56xf32> to vector<2x16x56xf32>
    %4 = tpu.concatenate %1, %2, %3 in 2 : vector<2x16x56xf32>, vector<2x16x56xf32>, vector<2x16x56xf32> -> vector<2x16x168xf32>
    %5 = vector.shape_cast %4 : vector<2x16x168xf32> to vector<32x168xf32>
    %c0_2 = arith.constant 0 : index
    %c0_3 = arith.constant 0 : index
    %6 = vector.load %arg2[%c0_2, %c0_3] : memref<168x480xf32, #tpu.memory_space<vmem>>, vector<168x480xf32>
    %cst = arith.constant dense<0.000000e+00> : vector<32x480xf32>
    %7 = tpu.matmul %5, %6, %cst {dimension_numbers = #tpu.dot_dimension_numbers<[1], [0], [0], [1], [0, 0, 1, 1], [], []>} : vector<32x168xf32>, vector<168x480xf32>, vector<32x480xf32> -> vector<32x480xf32>
    %c0_4 = arith.constant 0 : index
    %c0_5 = arith.constant 0 : index
    %8 = vector.load %arg3[%c0_4, %c0_5] : memref<1x480xf32, #tpu.memory_space<vmem>>, vector<1x480xf32>
    %9 = vector.broadcast %8 : vector<1x480xf32> to vector<32x480xf32>
    %10 = arith.addf %7, %9 : vector<32x480xf32>
    %11 = vector.extract_strided_slice %10 {offsets = [0, 0], sizes = [32, 240], strides = [1, 1]} : vector<32x480xf32> to vector<32x240xf32>
    %12 = vector.extract_strided_slice %10 {offsets = [0, 240], sizes = [32, 240], strides = [1, 1]} : vector<32x480xf32> to vector<32x240xf32>
    %13 = arith.maximumf %11, %12 : vector<32x240xf32>
    %14 = vector.extract_strided_slice %13 {offsets = [0, 0], sizes = [32, 230], strides = [1, 1]} : vector<32x240xf32> to vector<32x230xf32>
    %15 = vector.extract_strided_slice %13 {offsets = [0, 10], sizes = [32, 230], strides = [1, 1]} : vector<32x240xf32> to vector<32x230xf32>
    %16 = arith.maximumf %14, %15 : vector<32x230xf32>
    %cst_6 = arith.constant 0.000000e+00 : f32
    %17 = vector.broadcast %cst_6 : f32 to vector<32x230xf32>
    %18 = arith.maximumf %16, %17 : vector<32x230xf32>
    %19 = vector.shape_cast %18 : vector<32x230xf32> to vector<2x16x230xf32>
    %20 = vector.extract_strided_slice %19 {offsets = [0, 0, 0], sizes = [2, 8, 230], strides = [1, 1, 1]} : vector<2x16x230xf32> to vector<2x8x230xf32>
    %21 = vector.shape_cast %20 : vector<2x8x230xf32> to vector<16x230xf32>
    %c0_7 = arith.constant 0 : index
    %c0_8 = arith.constant 0 : index
    %c0_9 = arith.constant 0 : index
    %22 = vector.load %arg4[%c0_7, %c0_8, %c0_9] : memref<5x230x160xf32, #tpu.memory_space<vmem>>, vector<1x230x160xf32>
    %23 = vector.shape_cast %22 : vector<1x230x160xf32> to vector<230x160xf32>
    %cst_10 = arith.constant dense<0.000000e+00> : vector<16x160xf32>
    %24 = tpu.matmul %21, %23, %cst_10 {dimension_numbers = #tpu.dot_dimension_numbers<[1], [0], [0], [1], [0, 0, 1, 1], [], []>} : vector<16x230xf32>, vector<230x160xf32>, vector<16x160xf32> -> vector<16x160xf32>
    %25 = vector.extract_strided_slice %19 {offsets = [0, 1, 0], sizes = [2, 8, 230], strides = [1, 1, 1]} : vector<2x16x230xf32> to vector<2x8x230xf32>
    %26 = vector.shape_cast %25 : vector<2x8x230xf32> to vector<16x230xf32>
    %c1 = arith.constant 1 : index
    %c0_11 = arith.constant 0 : index
    %c0_12 = arith.constant 0 : index
    %27 = vector.load %arg4[%c1, %c0_11, %c0_12] : memref<5x230x160xf32, #tpu.memory_space<vmem>>, vector<1x230x160xf32>
    %28 = vector.shape_cast %27 : vector<1x230x160xf32> to vector<230x160xf32>
    %cst_13 = arith.constant dense<0.000000e+00> : vector<16x160xf32>
    %29 = tpu.matmul %26, %28, %cst_13 {dimension_numbers = #tpu.dot_dimension_numbers<[1], [0], [0], [1], [0, 0, 1, 1], [], []>} : vector<16x230xf32>, vector<230x160xf32>, vector<16x160xf32> -> vector<16x160xf32>
    %30 = arith.addf %24, %29 : vector<16x160xf32>
    %31 = vector.extract_strided_slice %19 {offsets = [0, 2, 0], sizes = [2, 8, 230], strides = [1, 1, 1]} : vector<2x16x230xf32> to vector<2x8x230xf32>
    %32 = vector.shape_cast %31 : vector<2x8x230xf32> to vector<16x230xf32>
    %c2 = arith.constant 2 : index
    %c0_14 = arith.constant 0 : index
    %c0_15 = arith.constant 0 : index
    %33 = vector.load %arg4[%c2, %c0_14, %c0_15] : memref<5x230x160xf32, #tpu.memory_space<vmem>>, vector<1x230x160xf32>
    %34 = vector.shape_cast %33 : vector<1x230x160xf32> to vector<230x160xf32>
    %cst_16 = arith.constant dense<0.000000e+00> : vector<16x160xf32>
    %35 = tpu.matmul %32, %34, %cst_16 {dimension_numbers = #tpu.dot_dimension_numbers<[1], [0], [0], [1], [0, 0, 1, 1], [], []>} : vector<16x230xf32>, vector<230x160xf32>, vector<16x160xf32> -> vector<16x160xf32>
    %36 = arith.addf %30, %35 : vector<16x160xf32>
    %37 = vector.extract_strided_slice %19 {offsets = [0, 3, 0], sizes = [2, 8, 230], strides = [1, 1, 1]} : vector<2x16x230xf32> to vector<2x8x230xf32>
    %38 = vector.shape_cast %37 : vector<2x8x230xf32> to vector<16x230xf32>
    %c3 = arith.constant 3 : index
    %c0_17 = arith.constant 0 : index
    %c0_18 = arith.constant 0 : index
    %39 = vector.load %arg4[%c3, %c0_17, %c0_18] : memref<5x230x160xf32, #tpu.memory_space<vmem>>, vector<1x230x160xf32>
    %40 = vector.shape_cast %39 : vector<1x230x160xf32> to vector<230x160xf32>
    %cst_19 = arith.constant dense<0.000000e+00> : vector<16x160xf32>
    %41 = tpu.matmul %38, %40, %cst_19 {dimension_numbers = #tpu.dot_dimension_numbers<[1], [0], [0], [1], [0, 0, 1, 1], [], []>} : vector<16x230xf32>, vector<230x160xf32>, vector<16x160xf32> -> vector<16x160xf32>
    %42 = arith.addf %36, %41 : vector<16x160xf32>
    %43 = vector.extract_strided_slice %19 {offsets = [0, 4, 0], sizes = [2, 8, 230], strides = [1, 1, 1]} : vector<2x16x230xf32> to vector<2x8x230xf32>
    %44 = vector.shape_cast %43 : vector<2x8x230xf32> to vector<16x230xf32>
    %c4 = arith.constant 4 : index
    %c0_20 = arith.constant 0 : index
    %c0_21 = arith.constant 0 : index
    %45 = vector.load %arg4[%c4, %c0_20, %c0_21] : memref<5x230x160xf32, #tpu.memory_space<vmem>>, vector<1x230x160xf32>
    %46 = vector.shape_cast %45 : vector<1x230x160xf32> to vector<230x160xf32>
    %cst_22 = arith.constant dense<0.000000e+00> : vector<16x160xf32>
    %47 = tpu.matmul %44, %46, %cst_22 {dimension_numbers = #tpu.dot_dimension_numbers<[1], [0], [0], [1], [0, 0, 1, 1], [], []>} : vector<16x230xf32>, vector<230x160xf32>, vector<16x160xf32> -> vector<16x160xf32>
    %48 = arith.addf %42, %47 : vector<16x160xf32>
    %c0_23 = arith.constant 0 : index
    %c0_24 = arith.constant 0 : index
    %49 = vector.load %arg5[%c0_23, %c0_24] : memref<1x160xf32, #tpu.memory_space<vmem>>, vector<1x160xf32>
    %50 = vector.broadcast %49 : vector<1x160xf32> to vector<16x160xf32>
    %51 = arith.addf %48, %50 : vector<16x160xf32>
    %52 = vector.extract_strided_slice %51 {offsets = [0, 0], sizes = [16, 140], strides = [1, 1]} : vector<16x160xf32> to vector<16x140xf32>
    %53 = vector.extract_strided_slice %51 {offsets = [0, 20], sizes = [16, 140], strides = [1, 1]} : vector<16x160xf32> to vector<16x140xf32>
    %54 = arith.maximumf %52, %53 : vector<16x140xf32>
    %55 = vector.shape_cast %54 : vector<16x140xf32> to vector<2x8x140xf32>
    %56 = vector.extract_strided_slice %55 {offsets = [0, 0, 0], sizes = [2, 1, 140], strides = [1, 1, 1]} : vector<2x8x140xf32> to vector<2x1x140xf32>
    %57 = vector.shape_cast %56 : vector<2x1x140xf32> to vector<2x140xf32>
    %58 = vector.extract_strided_slice %55 {offsets = [0, 1, 0], sizes = [2, 1, 140], strides = [1, 1, 1]} : vector<2x8x140xf32> to vector<2x1x140xf32>
    %59 = vector.shape_cast %58 : vector<2x1x140xf32> to vector<2x140xf32>
    %60 = arith.maximumf %57, %59 : vector<2x140xf32>
    %cst_25 = arith.constant 0.000000e+00 : f32
    %61 = vector.broadcast %cst_25 : f32 to vector<2x140xf32>
    %62 = arith.maximumf %60, %61 : vector<2x140xf32>
    %c0_26 = arith.constant 0 : index
    %c0_27 = arith.constant 0 : index
    %c0_28 = arith.constant 0 : index
    %63 = vector.load %arg6[%c0_26, %c0_27, %c0_28] : memref<4x140x128xf32, #tpu.memory_space<vmem>>, vector<1x140x128xf32>
    %64 = vector.shape_cast %63 : vector<1x140x128xf32> to vector<140x128xf32>
    %cst_29 = arith.constant dense<0.000000e+00> : vector<2x128xf32>
    %65 = tpu.matmul %62, %64, %cst_29 {dimension_numbers = #tpu.dot_dimension_numbers<[1], [0], [0], [1], [0, 0, 1, 1], [], []>} : vector<2x140xf32>, vector<140x128xf32>, vector<2x128xf32> -> vector<2x128xf32>
    %66 = vector.extract_strided_slice %55 {offsets = [0, 2, 0], sizes = [2, 1, 140], strides = [1, 1, 1]} : vector<2x8x140xf32> to vector<2x1x140xf32>
    %67 = vector.shape_cast %66 : vector<2x1x140xf32> to vector<2x140xf32>
    %68 = vector.extract_strided_slice %55 {offsets = [0, 3, 0], sizes = [2, 1, 140], strides = [1, 1, 1]} : vector<2x8x140xf32> to vector<2x1x140xf32>
    %69 = vector.shape_cast %68 : vector<2x1x140xf32> to vector<2x140xf32>
    %70 = arith.maximumf %67, %69 : vector<2x140xf32>
    %cst_30 = arith.constant 0.000000e+00 : f32
    %71 = vector.broadcast %cst_30 : f32 to vector<2x140xf32>
    %72 = arith.maximumf %70, %71 : vector<2x140xf32>
    %c1_31 = arith.constant 1 : index
    %c0_32 = arith.constant 0 : index
    %c0_33 = arith.constant 0 : index
    %73 = vector.load %arg6[%c1_31, %c0_32, %c0_33] : memref<4x140x128xf32, #tpu.memory_space<vmem>>, vector<1x140x128xf32>
    %74 = vector.shape_cast %73 : vector<1x140x128xf32> to vector<140x128xf32>
    %cst_34 = arith.constant dense<0.000000e+00> : vector<2x128xf32>
    %75 = tpu.matmul %72, %74, %cst_34 {dimension_numbers = #tpu.dot_dimension_numbers<[1], [0], [0], [1], [0, 0, 1, 1], [], []>} : vector<2x140xf32>, vector<140x128xf32>, vector<2x128xf32> -> vector<2x128xf32>
    %76 = arith.addf %65, %75 : vector<2x128xf32>
    %77 = vector.extract_strided_slice %55 {offsets = [0, 4, 0], sizes = [2, 1, 140], strides = [1, 1, 1]} : vector<2x8x140xf32> to vector<2x1x140xf32>
    %78 = vector.shape_cast %77 : vector<2x1x140xf32> to vector<2x140xf32>
    %79 = vector.extract_strided_slice %55 {offsets = [0, 5, 0], sizes = [2, 1, 140], strides = [1, 1, 1]} : vector<2x8x140xf32> to vector<2x1x140xf32>
    %80 = vector.shape_cast %79 : vector<2x1x140xf32> to vector<2x140xf32>
    %81 = arith.maximumf %78, %80 : vector<2x140xf32>
    %cst_35 = arith.constant 0.000000e+00 : f32
    %82 = vector.broadcast %cst_35 : f32 to vector<2x140xf32>
    %83 = arith.maximumf %81, %82 : vector<2x140xf32>
    %c2_36 = arith.constant 2 : index
    %c0_37 = arith.constant 0 : index
    %c0_38 = arith.constant 0 : index
    %84 = vector.load %arg6[%c2_36, %c0_37, %c0_38] : memref<4x140x128xf32, #tpu.memory_space<vmem>>, vector<1x140x128xf32>
    %85 = vector.shape_cast %84 : vector<1x140x128xf32> to vector<140x128xf32>
    %cst_39 = arith.constant dense<0.000000e+00> : vector<2x128xf32>
    %86 = tpu.matmul %83, %85, %cst_39 {dimension_numbers = #tpu.dot_dimension_numbers<[1], [0], [0], [1], [0, 0, 1, 1], [], []>} : vector<2x140xf32>, vector<140x128xf32>, vector<2x128xf32> -> vector<2x128xf32>
    %87 = arith.addf %76, %86 : vector<2x128xf32>
    %88 = vector.extract_strided_slice %55 {offsets = [0, 6, 0], sizes = [2, 1, 140], strides = [1, 1, 1]} : vector<2x8x140xf32> to vector<2x1x140xf32>
    %89 = vector.shape_cast %88 : vector<2x1x140xf32> to vector<2x140xf32>
    %90 = vector.extract_strided_slice %55 {offsets = [0, 7, 0], sizes = [2, 1, 140], strides = [1, 1, 1]} : vector<2x8x140xf32> to vector<2x1x140xf32>
    %91 = vector.shape_cast %90 : vector<2x1x140xf32> to vector<2x140xf32>
    %92 = arith.maximumf %89, %91 : vector<2x140xf32>
    %cst_40 = arith.constant 0.000000e+00 : f32
    %93 = vector.broadcast %cst_40 : f32 to vector<2x140xf32>
    %94 = arith.maximumf %92, %93 : vector<2x140xf32>
    %c3_41 = arith.constant 3 : index
    %c0_42 = arith.constant 0 : index
    %c0_43 = arith.constant 0 : index
    %95 = vector.load %arg6[%c3_41, %c0_42, %c0_43] : memref<4x140x128xf32, #tpu.memory_space<vmem>>, vector<1x140x128xf32>
    %96 = vector.shape_cast %95 : vector<1x140x128xf32> to vector<140x128xf32>
    %cst_44 = arith.constant dense<0.000000e+00> : vector<2x128xf32>
    %97 = tpu.matmul %94, %96, %cst_44 {dimension_numbers = #tpu.dot_dimension_numbers<[1], [0], [0], [1], [0, 0, 1, 1], [], []>} : vector<2x140xf32>, vector<140x128xf32>, vector<2x128xf32> -> vector<2x128xf32>
    %98 = arith.addf %87, %97 : vector<2x128xf32>
    %c0_45 = arith.constant 0 : index
    %c0_46 = arith.constant 0 : index
    %99 = vector.load %arg7[%c0_45, %c0_46] : memref<1x128xf32, #tpu.memory_space<vmem>>, vector<1x128xf32>
    %100 = vector.broadcast %99 : vector<1x128xf32> to vector<2x128xf32>
    %101 = arith.addf %98, %100 : vector<2x128xf32>
    %cst_47 = arith.constant 0.000000e+00 : f32
    %102 = vector.broadcast %cst_47 : f32 to vector<2x128xf32>
    %103 = arith.maximumf %101, %102 : vector<2x128xf32>
    %c0_48 = arith.constant 0 : index
    %c0_49 = arith.constant 0 : index
    %104 = vector.load %arg8[%c0_48, %c0_49] : memref<128x10xf32, #tpu.memory_space<vmem>>, vector<128x10xf32>
    %cst_50 = arith.constant dense<0.000000e+00> : vector<2x10xf32>
    %105 = tpu.matmul %103, %104, %cst_50 {dimension_numbers = #tpu.dot_dimension_numbers<[1], [0], [0], [1], [0, 0, 1, 1], [], []>} : vector<2x128xf32>, vector<128x10xf32>, vector<2x10xf32> -> vector<2x10xf32>
    %c0_51 = arith.constant 0 : index
    %c0_52 = arith.constant 0 : index
    %106 = vector.load %arg9[%c0_51, %c0_52] : memref<1x10xf32, #tpu.memory_space<vmem>>, vector<1x10xf32>
    %107 = vector.broadcast %106 : vector<1x10xf32> to vector<2x10xf32>
    %108 = arith.addf %105, %107 : vector<2x10xf32>
    %cst_53 = arith.constant dense<0xFF800000> : vector<2xf32>
    %109 = vector.multi_reduction <maximumf>, %108, %cst_53 [1] : vector<2x10xf32> to vector<2xf32>
    %110 = vector.shape_cast %109 : vector<2xf32> to vector<2x1xf32>
    %111 = vector.broadcast %110 : vector<2x1xf32> to vector<2x10xf32>
    %112 = arith.subf %108, %111 : vector<2x10xf32>
    %113 = math.exp %112 : vector<2x10xf32>
    %cst_54 = arith.constant dense<0.000000e+00> : vector<2xf32>
    %114 = vector.multi_reduction <add>, %113, %cst_54 [1] : vector<2x10xf32> to vector<2xf32>
    %115 = vector.shape_cast %114 : vector<2xf32> to vector<2x1xf32>
    %116 = math.log %115 : vector<2x1xf32>
    %117 = arith.addf %110, %116 : vector<2x1xf32>
    %118 = vector.broadcast %117 : vector<2x1xf32> to vector<2x10xf32>
    %119 = arith.subf %108, %118 : vector<2x10xf32>
    %c0_55 = arith.constant 0 : index
    %c0_56 = arith.constant 0 : index
    %120 = vector.load %arg10[%c0_55, %c0_56] : memref<2x10xf32, #tpu.memory_space<vmem>>, vector<2x10xf32>
    tpu.vector_store %arg10[%c0_55, %c0_56], %119 {strides = array<i32>} : memref<2x10xf32, #tpu.memory_space<vmem>>, vector<2x10xf32>,
    return
  }
  func.func @transform_0(%arg0: i32) -> (i32, i32, i32) {
    %c0_i32 = arith.constant 0 : i32
    %c0_i32_0 = arith.constant 0 : i32
    %c0_i32_1 = arith.constant 0 : i32
    return %arg0, %c0_i32, %c0_i32_0 : i32, i32, i32
  }
  func.func @transform_1(%arg0: i32) -> (i32, i32) {
    %c0_i32 = arith.constant 0 : i32
    %c0_i32_0 = arith.constant 0 : i32
    %c0_i32_1 = arith.constant 0 : i32
    return %c0_i32, %c0_i32_0 : i32, i32
  }
  func.func @transform_2(%arg0: i32) -> (i32, i32) {
    %c0_i32 = arith.constant 0 : i32
    %c0_i32_0 = arith.constant 0 : i32
    %c0_i32_1 = arith.constant 0 : i32
    return %c0_i32, %c0_i32_0 : i32, i32
  }
  func.func @transform_3(%arg0: i32) -> (i32, i32, i32) {
    %c0_i32 = arith.constant 0 : i32
    %c0_i32_0 = arith.constant 0 : i32
    %c0_i32_1 = arith.constant 0 : i32
    %c0_i32_2 = arith.constant 0 : i32
    return %c0_i32, %c0_i32_0, %c0_i32_1 : i32, i32, i32
  }
  func.func @transform_4(%arg0: i32) -> (i32, i32) {
    %c0_i32 = arith.constant 0 : i32
    %c0_i32_0 = arith.constant 0 : i32
    %c0_i32_1 = arith.constant 0 : i32
    return %c0_i32, %c0_i32_0 : i32, i32
  }
  func.func @transform_5(%arg0: i32) -> (i32, i32, i32) {
    %c0_i32 = arith.constant 0 : i32
    %c0_i32_0 = arith.constant 0 : i32
    %c0_i32_1 = arith.constant 0 : i32
    %c0_i32_2 = arith.constant 0 : i32
    return %c0_i32, %c0_i32_0, %c0_i32_1 : i32, i32, i32
  }
  func.func @transform_6(%arg0: i32) -> (i32, i32) {
    %c0_i32 = arith.constant 0 : i32
    %c0_i32_0 = arith.constant 0 : i32
    %c0_i32_1 = arith.constant 0 : i32
    return %c0_i32, %c0_i32_0 : i32, i32
  }
  func.func @transform_7(%arg0: i32) -> (i32, i32) {
    %c0_i32 = arith.constant 0 : i32
    %c0_i32_0 = arith.constant 0 : i32
    %c0_i32_1 = arith.constant 0 : i32
    return %c0_i32, %c0_i32_0 : i32, i32
  }
  func.func @transform_8(%arg0: i32) -> (i32, i32) {
    %c0_i32 = arith.constant 0 : i32
    %c0_i32_0 = arith.constant 0 : i32
    %c0_i32_1 = arith.constant 0 : i32
    return %c0_i32, %c0_i32_0 : i32, i32
  }
  func.func @transform_9(%arg0: i32) -> (i32, i32) {
    %c0_i32 = arith.constant 0 : i32
    %c0_i32_0 = arith.constant 0 : i32
    return %arg0, %c0_i32 : i32, i32
  }
}

</mosaic_0001>

<llo_original>
// kernel: net_forward.1
$region0: #{net_forward.1}
  #allocation0 [shape = 'u32[]', space=smem, size = 0x4, offset = 0x4, fixed_abs, tag = 'smem constant byte address 0x4 - core index']
  #allocation1 [shape = 'u32[72,128]{1,0:T(1,128)}', space=vmem, size = 0x9000, scoped, tag = 'internal scratch']
  %s0 = inlined_call_operand.vmem [shape: f32[2,18,56], index: 0, kind: input, shape index: {}]
  %s1 = inlined_call_operand.hbm [shape: f32[168,480], index: 1, kind: input, shape index: {}]
  %s2 = inlined_call_operand.hbm [shape: f32[1,480], index: 2, kind: input, shape index: {}]
  %s3 = inlined_call_operand.hbm [shape: f32[5,230,160], index: 3, kind: input, shape index: {}]
  %s4 = inlined_call_operand.hbm [shape: f32[1,160], index: 4, kind: input, shape index: {}]
  %s5 = inlined_call_operand.hbm [shape: f32[4,140,128], index: 5, kind: input, shape index: {}]
  %s6 = inlined_call_operand.hbm [shape: f32[1,128], index: 6, kind: input, shape index: {}]
  %s7 = inlined_call_operand.hbm [shape: f32[128,10], index: 7, kind: input, shape index: {}]
  %s8 = inlined_call_operand.hbm [shape: f32[1,10], index: 8, kind: input, shape index: {}]
  %s9 = inlined_call_operand.hbm [shape: f32[2,10], index: 9, kind: output, shape index: {}]
  %s10 = sld [smem:[#allocation0]]
  $region78: #{net_forward.1} parent=0
    _
  %s12 = ssub.s32 1, %s10
  %s13 = scalar_select 0, %s12, %s10
  $region1: #{net_forward.1} parent=0
    #allocation2 [shape = 'u8[344064]{0}', space=vmem, size = 0x54000, scoped, tag = 'input window, operand 1, single buffered']
    #allocation3 [shape = 's32[1]{0}', space=sflag, size = 0x4, scoped, tag = 'scoped memory for net_forward.1']
    #allocation4 [shape = 's32[1]{0}', space=sflag, size = 0x4, scoped, tag = 'scoped memory for net_forward.1']
    #allocation5 [shape = 'u8[2048]{0}', space=vmem, size = 0x800, scoped, tag = 'input window, operand 2, single buffered']
    #allocation6 [shape = 's32[1]{0}', space=sflag, size = 0x4, scoped, tag = 'scoped memory for net_forward.1']
    #allocation7 [shape = 'u8[1187840]{0}', space=vmem, size = 0x122000, scoped, tag = 'input window, operand 3, single buffered']
    #allocation8 [shape = 'u8[1024]{0}', space=vmem, size = 0x400, scoped, tag = 'input window, operand 4, single buffered']
    #allocation9 [shape = 's32[1]{0}', space=sflag, size = 0x4, scoped, tag = 'scoped memory for net_forward.1']
    #allocation10 [shape = 'u8[294912]{0}', space=vmem, size = 0x48000, scoped, tag = 'input window, operand 5, single buffered']
    #allocation11 [shape = 'u8[512]{0}', space=vmem, size = 0x400, scoped, tag = 'input window, operand 6, single buffered']
    #allocation12 [shape = 's32[1]{0}', space=sflag, size = 0x4, scoped, tag = 'scoped memory for net_forward.1']
    #allocation13 [shape = 'u8[65536]{0}', space=vmem, size = 0x10000, scoped, tag = 'input window, operand 7, single buffered']
    #allocation14 [shape = 'u8[512]{0}', space=vmem, size = 0x400, scoped, tag = 'input window, operand 8, single buffered']
    #allocation15 [shape = 's32[1]{0}', space=sflag, size = 0x4, scoped, tag = 'scoped memory for net_forward.1']
    #allocation16 [shape = 'u8[1024]{0}', space=vmem, size = 0x400, scoped, tag = 'output window, operand 0, single buffered']
    %14 = vsyncpa [#allocation3], 0
    %15 = vsyncpa [#allocation6], 0
    %16 = vsyncpa [#allocation9], 0
    %17 = vsyncpa [#allocation12], 0
    %18 = vsyncpa [#allocation15], 0
    %19 = vsyncpa [#allocation4], 0
    // Predicated region
    $region2: #{net_forward.1} parent=1 // pred_check
      _
    $region3: #{net_forward.1} parent=1 // pred_check_branch
      %21 = sbr.rel (0) target = $region5
    $region4: #{net_forward.1} parent=1 // pred_region
      _
    $region5: #{net_forward.1} parent=1 // pred_fallthru
      _
    // Predicated region
    $region6: #{net_forward.1} parent=1 // pred_check
      _
    $region7: #{net_forward.1} parent=1 // pred_check_branch
      %23 = sbr.rel (0) target = $region9
    $region8: #{net_forward.1} parent=1 // pred_region
      %25 = vsyncadd [#allocation3], 0
      %s26 = sshll.u32 %s1, 4
      %s27 = int_to_ptr.hbm [resolvable:$true] %s26
      %s28 = sshll.u32 [#allocation2], 4
      %s29 = int_to_ptr.vmem [resolvable:$true] %s28
      %34 = dma.hbm_to_vmem [thread:$0]  %s27, 10752, %s29, [#allocation3], 512, 512, 32
    $region9: #{net_forward.1} parent=1 // pred_fallthru
      _
    // Predicated region
    $region10: #{net_forward.1} parent=1 // pred_check
      _
    $region11: #{net_forward.1} parent=1 // pred_check_branch
      %36 = sbr.rel (0) target = $region13
    $region12: #{net_forward.1} parent=1 // pred_region
      %38 = vsyncadd [#allocation6], 0
      %s40 = sshll.u32 %s2, 4
      %s41 = int_to_ptr.hbm [resolvable:$true] %s40
      %s42 = sshll.u32 [#allocation5], 4
      %s43 = int_to_ptr.vmem [resolvable:$true] %s42
      %45 = dma.hbm_to_vmem [thread:$0]  %s41, 64, %s43, [#allocation6]
    $region13: #{net_forward.1} parent=1 // pred_fallthru
      _
    // Predicated region
    $region14: #{net_forward.1} parent=1 // pred_check
      _
    $region15: #{net_forward.1} parent=1 // pred_check_branch
      %47 = sbr.rel (0) target = $region17
    $region16: #{net_forward.1} parent=1 // pred_region
      %49 = vsyncadd [#allocation6], 0
      %s50 = sshll.u32 %s3, 4
      %s51 = int_to_ptr.hbm [resolvable:$true] %s50
      %s52 = sshll.u32 [#allocation7], 4
      %s53 = int_to_ptr.vmem [resolvable:$true] %s52
      %58 = dma.hbm_to_vmem [thread:$0]  %s51, 37120, %s53, [#allocation6], 256, 256, 16
    $region17: #{net_forward.1} parent=1 // pred_fallthru
      _
    // Predicated region
    $region18: #{net_forward.1} parent=1 // pred_check
      _
    $region19: #{net_forward.1} parent=1 // pred_check_branch
      %60 = sbr.rel (0) target = $region21
    $region20: #{net_forward.1} parent=1 // pred_region
      %62 = vsyncadd [#allocation9], 0
      %s64 = sshll.u32 %s4, 4
      %s65 = int_to_ptr.hbm [resolvable:$true] %s64
      %s66 = sshll.u32 [#allocation8], 4
      %s67 = int_to_ptr.vmem [resolvable:$true] %s66
      %69 = dma.hbm_to_vmem [thread:$0]  %s65, 32, %s67, [#allocation9]
    $region21: #{net_forward.1} parent=1 // pred_fallthru
      _
    // Predicated region
    $region22: #{net_forward.1} parent=1 // pred_check
      _
    $region23: #{net_forward.1} parent=1 // pred_check_branch
      %71 = sbr.rel (0) target = $region25
    $region24: #{net_forward.1} parent=1 // pred_region
      %73 = vsyncadd [#allocation9], 0
      %s74 = sshll.u32 %s5, 4
      %s75 = int_to_ptr.hbm [resolvable:$true] %s74
      %s76 = sshll.u32 [#allocation10], 4
      %s77 = int_to_ptr.vmem [resolvable:$true] %s76
      %82 = dma.hbm_to_vmem [thread:$0]  %s75, 9216, %s77, [#allocation9], 128, 128, 8
    $region25: #{net_forward.1} parent=1 // pred_fallthru
      _
    // Predicated region
    $region26: #{net_forward.1} parent=1 // pred_check
      _
    $region27: #{net_forward.1} parent=1 // pred_check_branch
      %84 = sbr.rel (0) target = $region29
    $region28: #{net_forward.1} parent=1 // pred_region
      %86 = vsyncadd [#allocation12], 0
      %s88 = sshll.u32 %s6, 4
      %s89 = int_to_ptr.hbm [resolvable:$true] %s88
      %s90 = sshll.u32 [#allocation11], 4
      %s91 = int_to_ptr.vmem [resolvable:$true] %s90
      %93 = dma.hbm_to_vmem [thread:$0]  %s89, 16, %s91, [#allocation12]
    $region29: #{net_forward.1} parent=1 // pred_fallthru
      _
    // Predicated region
    $region30: #{net_forward.1} parent=1 // pred_check
      _
    $region31: #{net_forward.1} parent=1 // pred_check_branch
      %95 = sbr.rel (0) target = $region33
    $region32: #{net_forward.1} parent=1 // pred_region
      %97 = vsyncadd [#allocation12], 0
      %s98 = sshll.u32 %s7, 4
      %s99 = int_to_ptr.hbm [resolvable:$true] %s98
      %s100 = sshll.u32 [#allocation13], 4
      %s101 = int_to_ptr.vmem [resolvable:$true] %s100
      %106 = dma.hbm_to_vmem [thread:$0]  %s99, 2048, %s101, [#allocation12], 128, 128, 8
    $region33: #{net_forward.1} parent=1 // pred_fallthru
      _
    // Predicated region
    $region34: #{net_forward.1} parent=1 // pred_check
      _
    $region35: #{net_forward.1} parent=1 // pred_check_branch
      %108 = sbr.rel (0) target = $region37
    $region36: #{net_forward.1} parent=1 // pred_region
      %110 = vsyncadd [#allocation15], 0
      %s112 = sshll.u32 %s8, 4
      %s113 = int_to_ptr.hbm [resolvable:$true] %s112
      %s114 = sshll.u32 [#allocation14], 4
      %s115 = int_to_ptr.vmem [resolvable:$true] %s114
      %117 = dma.hbm_to_vmem [thread:$0]  %s113, 16, %s115, [#allocation15]
    $region37: #{net_forward.1} parent=1 // pred_fallthru
      _
    // Predicated region
    $region38: #{net_forward.1} parent=1 // pred_check
      _
    $region39: #{net_forward.1} parent=1 // pred_check_branch
      %119 = sbr.rel (0) target = $region41
    $region40: #{net_forward.1} parent=1 // pred_region
      %121 = dma.done [#allocation3], 10752
    $region41: #{net_forward.1} parent=1 // pred_fallthru
      _
    // Predicated region
    $region42: #{net_forward.1} parent=1 // pred_check
      _
    $region43: #{net_forward.1} parent=1 // pred_check_branch
      %123 = sbr.rel (0) target = $region45
    $region44: #{net_forward.1} parent=1 // pred_region
      %125 = dma.done [#allocation6], 64
    $region45: #{net_forward.1} parent=1 // pred_fallthru
      _
    // Predicated region
    $region46: #{net_forward.1} parent=1 // pred_check
      _
    $region47: #{net_forward.1} parent=1 // pred_check_branch
      %127 = sbr.rel (0) target = $region49
    $region48: #{net_forward.1} parent=1 // pred_region
      %129 = dma.done [#allocation6], 37120
    $region49: #{net_forward.1} parent=1 // pred_fallthru
      _
    // Predicated region
    $region50: #{net_forward.1} parent=1 // pred_check
      _
    $region51: #{net_forward.1} parent=1 // pred_check_branch
      %131 = sbr.rel (0) target = $region53
    $region52: #{net_forward.1} parent=1 // pred_region
      %133 = dma.done [#allocation9], 32
    $region53: #{net_forward.1} parent=1 // pred_fallthru
      _
    // Predicated region
    $region54: #{net_forward.1} parent=1 // pred_check
      _
    $region55: #{net_forward.1} parent=1 // pred_check_branch
      %135 = sbr.rel (0) target = $region57
    $region56: #{net_forward.1} parent=1 // pred_region
      %137 = dma.done [#allocation9], 9216
    $region57: #{net_forward.1} parent=1 // pred_fallthru
      _
    // Predicated region
    $region58: #{net_forward.1} parent=1 // pred_check
      _
    $region59: #{net_forward.1} parent=1 // pred_check_branch
      %139 = sbr.rel (0) target = $region61
    $region60: #{net_forward.1} parent=1 // pred_region
      %141 = dma.done [#allocation12], 16
    $region61: #{net_forward.1} parent=1 // pred_fallthru
      _
    // Predicated region
    $region62: #{net_forward.1} parent=1 // pred_check
      _
    $region63: #{net_forward.1} parent=1 // pred_check_branch
      %143 = sbr.rel (0) target = $region65
    $region64: #{net_forward.1} parent=1 // pred_region
      %145 = dma.done [#allocation12], 2048
    $region65: #{net_forward.1} parent=1 // pred_fallthru
      _
    // Predicated region
    $region66: #{net_forward.1} parent=1 // pred_check
      _
    $region67: #{net_forward.1} parent=1 // pred_check_branch
      %147 = sbr.rel (0) target = $region69
    $region68: #{net_forward.1} parent=1 // pred_region
      %149 = dma.done [#allocation15], 16
    $region69: #{net_forward.1} parent=1 // pred_fallthru
      _
    %v150 = vld [vmem:[%s0] sm:$0xff]
    %v151 = vld [vmem:[%s0 + $0x8] sm:$0xff]
    %v152 = vld [vmem:[%s0 + $0x10] sm:$0x3]
    %v153 = vld [vmem:[%s0 + $0x18] sm:$0xff]
    %v154 = vld [vmem:[%s0 + $0x20] sm:$0xff]
    %v155 = vld [vmem:[%s0 + $0x28] sm:$0x3]
    %vm162 = vcmask 1046528
    %v163 = vrot.slane %v150, 1
    %v164 = vrot.slane %v151, 1
    %v165 = vsel %vm162, %v163, %v164
    %v166 = vrot.slane %v152, 1
    %v167 = vsel %vm162, %v164, %v166
    %v168 = vrot.slane %v153, 1
    %v169 = vrot.slane %v154, 1
    %v170 = vsel %vm162, %v168, %v169
    %v171 = vrot.slane %v155, 1
    %v172 = vsel %vm162, %v169, %v171
    %173 = vrot.lane.b32.xlu0 %v165, 56
    %v174 = vpop.permute.xlu0 %173
    %175 = vrot.lane.b32.xlu0 %v167, 56
    %v176 = vpop.permute.xlu0 %175
    %177 = vrot.lane.b32.xlu0 %v170, 56
    %v178 = vpop.permute.xlu0 %177
    %179 = vrot.lane.b32.xlu0 %v172, 56
    %v180 = vpop.permute.xlu0 %179
    %vm185 = vcmask 1045504
    %v186 = vrot.slane %v150, 2
    %v187 = vrot.slane %v151, 2
    %v188 = vsel %vm185, %v186, %v187
    %v189 = vrot.slane %v152, 2
    %v190 = vsel %vm185, %v187, %v189
    %v191 = vrot.slane %v153, 2
    %v192 = vrot.slane %v154, 2
    %v193 = vsel %vm185, %v191, %v192
    %v194 = vrot.slane %v155, 2
    %v195 = vsel %vm185, %v192, %v194
    %196 = vrot.lane.b32.xlu0 %v188, 112
    %v197 = vpop.permute.xlu0 %196
    %198 = vrot.lane.b32.xlu0 %v190, 112
    %v199 = vpop.permute.xlu0 %198
    %200 = vrot.lane.b32.xlu0 %v193, 112
    %v201 = vpop.permute.xlu0 %200
    %202 = vrot.lane.b32.xlu0 %v195, 112
    %v203 = vpop.permute.xlu0 %202
    %vm208 = vcmask 457728
    %v209 = vsel %vm208, %v150, %v174
    %v210 = vsel %vm208, %v151, %v176
    %v211 = vsel %vm208, %v153, %v178
    %v212 = vsel %vm208, %v154, %v180
    %vm213 = vcmask 916480
    %v214 = vsel %vm213, %v209, %v197
    %v215 = vsel %vm213, %v210, %v199
    %v216 = vsel %vm213, %v211, %v201
    %v217 = vsel %vm213, %v212, %v203
    %v218 = vld [vmem:[#allocation2] sm:$0xff]
    %v219 = vld [vmem:[#allocation2 + $0x8] sm:$0xff]
    %v220 = vld [vmem:[#allocation2 + $0x10] sm:$0xff]
    %v221 = vld [vmem:[#allocation2 + $0x18] sm:$0xff]
    %v222 = vld [vmem:[#allocation2 + $0x20] sm:$0xff]
    %v223 = vld [vmem:[#allocation2 + $0x28] sm:$0xff]
    %v224 = vld [vmem:[#allocation2 + $0x30] sm:$0xff]
    %v225 = vld [vmem:[#allocation2 + $0x38] sm:$0xff]
    %v226 = vld [vmem:[#allocation2 + $0x40] sm:$0xff]
    %v227 = vld [vmem:[#allocation2 + $0x48] sm:$0xff]
    %v228 = vld [vmem:[#allocation2 + $0x50] sm:$0xff]
    %v229 = vld [vmem:[#allocation2 + $0x58] sm:$0xff]
    %v230 = vld [vmem:[#allocation2 + $0x60] sm:$0xff]
    %v231 = vld [vmem:[#allocation2 + $0x68] sm:$0xff]
    %v232 = vld [vmem:[#allocation2 + $0x70] sm:$0xff]
    %v233 = vld [vmem:[#allocation2 + $0x78] sm:$0xff]
    %v234 = vld [vmem:[#allocation2 + $0x80] sm:$0xff]
    %v235 = vld [vmem:[#allocation2 + $0x88] sm:$0xff]
    %v236 = vld [vmem:[#allocation2 + $0x90] sm:$0xff]
    %v237 = vld [vmem:[#allocation2 + $0x98] sm:$0xff]
    %v238 = vld [vmem:[#allocation2 + $0xa0] sm:$0xff]
    %v239 = vld [vmem:[#allocation2 + $0xa8] sm:$0xff]
    %v240 = vld [vmem:[#allocation2 + $0xb0] sm:$0xff]
    %v241 = vld [vmem:[#allocation2 + $0xb8] sm:$0xff]
    %v242 = vld [vmem:[#allocation2 + $0xc0] sm:$0xff]
    %v243 = vld [vmem:[#allocation2 + $0xc8] sm:$0xff]
    %v244 = vld [vmem:[#allocation2 + $0xd0] sm:$0xff]
    %v245 = vld [vmem:[#allocation2 + $0xd8] sm:$0xff]
    %v246 = vld [vmem:[#allocation2 + $0xe0] sm:$0xff]
    %v247 = vld [vmem:[#allocation2 + $0xe8] sm:$0xff]
    %v248 = vld [vmem:[#allocation2 + $0xf0] sm:$0xff]
    %v249 = vld [vmem:[#allocation2 + $0xf8] sm:$0xff]
    %v250 = vld [vmem:[#allocation2 + $0x100] sm:$0xff]
    %v251 = vld [vmem:[#allocation2 + $0x108] sm:$0xff]
    %v252 = vld [vmem:[#allocation2 + $0x110] sm:$0xff]
    %v253 = vld [vmem:[#allocation2 + $0x118] sm:$0xff]
    %v254 = vld [vmem:[#allocation2 + $0x120] sm:$0xff]
    %v255 = vld [vmem:[#allocation2 + $0x128] sm:$0xff]
    %v256 = vld [vmem:[#allocation2 + $0x130] sm:$0xff]
    %v257 = vld [vmem:[#allocation2 + $0x138] sm:$0xff]
    %v258 = vld [vmem:[#allocation2 + $0x140] sm:$0xff]
    %v259 = vld [vmem:[#allocation2 + $0x148] sm:$0xff]
    %v260 = vld [vmem:[#allocation2 + $0x150] sm:$0xff]
    %v261 = vld [vmem:[#allocation2 + $0x158] sm:$0xff]
    %v262 = vld [vmem:[#allocation2 + $0x160] sm:$0xff]
    %v263 = vld [vmem:[#allocation2 + $0x168] sm:$0xff]
    %v264 = vld [vmem:[#allocation2 + $0x170] sm:$0xff]
    %v265 = vld [vmem:[#allocation2 + $0x178] sm:$0xff]
    %v266 = vld [vmem:[#allocation2 + $0x180] sm:$0xff]
    %v267 = vld [vmem:[#allocation2 + $0x188] sm:$0xff]
    %v268 = vld [vmem:[#allocation2 + $0x190] sm:$0xff]
    %v269 = vld [vmem:[#allocation2 + $0x198] sm:$0xff]
    %v270 = vld [vmem:[#allocation2 + $0x1a0] sm:$0xff]
    %v271 = vld [vmem:[#allocation2 + $0x1a8] sm:$0xff]
    %v272 = vld [vmem:[#allocation2 + $0x1b0] sm:$0xff]
    %v273 = vld [vmem:[#allocation2 + $0x1b8] sm:$0xff]
    %v274 = vld [vmem:[#allocation2 + $0x1c0] sm:$0xff]
    %v275 = vld [vmem:[#allocation2 + $0x1c8] sm:$0xff]
    %v276 = vld [vmem:[#allocation2 + $0x1d0] sm:$0xff]
    %v277 = vld [vmem:[#allocation2 + $0x1d8] sm:$0xff]
    %v278 = vld [vmem:[#allocation2 + $0x1e0] sm:$0xff]
    %v279 = vld [vmem:[#allocation2 + $0x1e8] sm:$0xff]
    %v280 = vld [vmem:[#allocation2 + $0x1f0] sm:$0xff]
    %v281 = vld [vmem:[#allocation2 + $0x1f8] sm:$0xff]
    %v282 = vld [vmem:[#allocation2 + $0x200] sm:$0xff]
    %v283 = vld [vmem:[#allocation2 + $0x208] sm:$0xff]
    %v284 = vld [vmem:[#allocation2 + $0x210] sm:$0xff]
    %v285 = vld [vmem:[#allocation2 + $0x218] sm:$0xff]
    %v286 = vld [vmem:[#allocation2 + $0x220] sm:$0xff]
    %v287 = vld [vmem:[#allocation2 + $0x228] sm:$0xff]
    %v288 = vld [vmem:[#allocation2 + $0x230] sm:$0xff]
    %v289 = vld [vmem:[#allocation2 + $0x238] sm:$0xff]
    %v290 = vld [vmem:[#allocation2 + $0x240] sm:$0xff]
    %v291 = vld [vmem:[#allocation2 + $0x248] sm:$0xff]
    %v292 = vld [vmem:[#allocation2 + $0x250] sm:$0xff]
    %v293 = vld [vmem:[#allocation2 + $0x258] sm:$0xff]
    %v294 = vld [vmem:[#allocation2 + $0x260] sm:$0xff]
    %v295 = vld [vmem:[#allocation2 + $0x268] sm:$0xff]
    %v296 = vld [vmem:[#allocation2 + $0x270] sm:$0xff]
    %v297 = vld [vmem:[#allocation2 + $0x278] sm:$0xff]
    %v298 = vld [vmem:[#allocation2 + $0x280] sm:$0xff]
    %v299 = vld [vmem:[#allocation2 + $0x288] sm:$0xff]
    %v300 = vld [vmem:[#allocation2 + $0x290] sm:$0xff]
    %v301 = vld [vmem:[#allocation2 + $0x298] sm:$0xff]
    %v302 = vld [vmem:[#allocation5] sm:$0xf]
    %v304 = vperm.slane %v302, 0
    %v305 = vperm.slane %v302, 1
    %v306 = vperm.slane %v302, 2
    %v307 = vperm.slane %v302, 3
    %vm312 = vcmask 326656
    %v313 = vsel %vm312, %v197, 0
    %v315 = vsel %vm312, %v199, 0
    %v317 = vsel %vm312, %v201, 0
    %v319 = vsel %vm312, %v203, 0
    %321 = vmatpush.msra.mxu0 %v278
    %322 = vmatpush.msra.mxu0 %v274
    %323 = vmatpush.msra.mxu0 %v270
    %324 = vmatpush.msra.mxu0 %v266
    %325 = vmatpush.msra.mxu0 %v262
    %326 = vmatpush.msra.mxu0 %v258
    %327 = vmatpush.msra.mxu0 %v254
    %328 = vmatpush.msra.mxu0 %v250
    %329 = vmatpush.msra.mxu0 %v246
    %330 = vmatpush.msra.mxu0 %v242
    %331 = vmatpush.msra.mxu0 %v238
    %332 = vmatpush.msra.mxu0 %v234
    %333 = vmatpush.msra.mxu0 %v230
    %334 = vmatpush.msra.mxu0 %v226
    %335 = vmatpush.msra.mxu0 %v222
    %336 = vmatpush.msra.mxu0 %v218
    %337 = vmatmul.f32.gmra.mxu0 %v214
    %v338 = vpop.f32.mrf.mxu0
    %v339 = vadd.f32 %v304, %v338
    %340 = vmatmul.f32.gmra.mxu0 %v215
    %v341 = vpop.f32.mrf.mxu0
    %v342 = vadd.f32 %v304, %v341
    %343 = vmatmul.f32.gmra.mxu0 %v216
    %v344 = vpop.f32.mrf.mxu0
    %v345 = vadd.f32 %v304, %v344
    %346 = vmatmul.f32.gmra.mxu0 %v217
    %v347 = vpop.f32.mrf.mxu0
    %v348 = vadd.f32 %v304, %v347
    %349 = vdwg.mxu0
    %350 = vmatpush.msra.mxu0 0.0
    %351 = vmatpush.msra.mxu0 0.0
    %352 = vmatpush.msra.mxu0 0.0
    %353 = vmatpush.msra.mxu0 0.0
    %354 = vmatpush.msra.mxu0 0.0
    %355 = vmatpush.msra.mxu0 0.0
    %356 = vmatpush.msra.mxu0 0.0
    %357 = vmatpush.msra.mxu0 0.0
    %358 = vmatpush.msra.mxu0 0.0
    %359 = vmatpush.msra.mxu0 0.0
    %360 = vmatpush.msra.mxu0 0.0
    %361 = vmatpush.msra.mxu0 %v298
    %362 = vmatpush.msra.mxu0 %v294
    %363 = vmatpush.msra.mxu0 %v290
    %364 = vmatpush.msra.mxu0 %v286
    %365 = vmatpush.msra.mxu0 %v282
    %366 = vmatmul.f32.gmra.mxu0 %v313
    %v367 = vpop.f32.mrf.mxu0
    %v368 = vadd.f32 %v339, %v367
    %369 = vmatmul.f32.gmra.mxu0 %v315
    %v370 = vpop.f32.mrf.mxu0
    %v371 = vadd.f32 %v342, %v370
    %372 = vmatmul.f32.gmra.mxu0 %v317
    %v373 = vpop.f32.mrf.mxu0
    %v374 = vadd.f32 %v345, %v373
    %375 = vmatmul.f32.gmra.mxu0 %v319
    %v376 = vpop.f32.mrf.mxu0
    %v377 = vadd.f32 %v348, %v376
    %378 = vdwg.mxu0
    %379 = vmatpush.msra.mxu0 %v279
    %380 = vmatpush.msra.mxu0 %v275
    %381 = vmatpush.msra.mxu0 %v271
    %382 = vmatpush.msra.mxu0 %v267
    %383 = vmatpush.msra.mxu0 %v263
    %384 = vmatpush.msra.mxu0 %v259
    %385 = vmatpush.msra.mxu0 %v255
    %386 = vmatpush.msra.mxu0 %v251
    %387 = vmatpush.msra.mxu0 %v247
    %388 = vmatpush.msra.mxu0 %v243
    %389 = vmatpush.msra.mxu0 %v239
    %390 = vmatpush.msra.mxu0 %v235
    %391 = vmatpush.msra.mxu0 %v231
    %392 = vmatpush.msra.mxu0 %v227
    %393 = vmatpush.msra.mxu0 %v223
    %394 = vmatpush.msra.mxu0 %v219
    %395 = vmatmul.f32.gmra.mxu0 %v214
    %v396 = vpop.f32.mrf.mxu0
    %v397 = vadd.f32 %v305, %v396
    %398 = vmatmul.f32.gmra.mxu0 %v215
    %v399 = vpop.f32.mrf.mxu0
    %v400 = vadd.f32 %v305, %v399
    %401 = vmatmul.f32.gmra.mxu0 %v216
    %v402 = vpop.f32.mrf.mxu0
    %v403 = vadd.f32 %v305, %v402
    %404 = vmatmul.f32.gmra.mxu0 %v217
    %v405 = vpop.f32.mrf.mxu0
    %v406 = vadd.f32 %v305, %v405
    %407 = vdwg.mxu0
    %408 = vmatpush.msra.mxu0 0.0
    %409 = vmatpush.msra.mxu0 0.0
    %410 = vmatpush.msra.mxu0 0.0
    %411 = vmatpush.msra.mxu0 0.0
    %412 = vmatpush.msra.mxu0 0.0
    %413 = vmatpush.msra.mxu0 0.0
    %414 = vmatpush.msra.mxu0 0.0
    %415 = vmatpush.msra.mxu0 0.0
    %416 = vmatpush.msra.mxu0 0.0
    %417 = vmatpush.msra.mxu0 0.0
    %418 = vmatpush.msra.mxu0 0.0
    %419 = vmatpush.msra.mxu0 %v299
    %420 = vmatpush.msra.mxu0 %v295
    %421 = vmatpush.msra.mxu0 %v291
    %422 = vmatpush.msra.mxu0 %v287
    %423 = vmatpush.msra.mxu0 %v283
    %424 = vmatmul.f32.gmra.mxu0 %v313
    %v425 = vpop.f32.mrf.mxu0
    %v426 = vadd.f32 %v397, %v425
    %427 = vmatmul.f32.gmra.mxu0 %v315
    %v428 = vpop.f32.mrf.mxu0
    %v429 = vadd.f32 %v400, %v428
    %430 = vmatmul.f32.gmra.mxu0 %v317
    %v431 = vpop.f32.mrf.mxu0
    %v432 = vadd.f32 %v403, %v431
    %433 = vmatmul.f32.gmra.mxu0 %v319
    %v434 = vpop.f32.mrf.mxu0
    %v435 = vadd.f32 %v406, %v434
    %436 = vdwg.mxu0
    %437 = vmatpush.msra.mxu0 %v280
    %438 = vmatpush.msra.mxu0 %v276
    %439 = vmatpush.msra.mxu0 %v272
    %440 = vmatpush.msra.mxu0 %v268
    %441 = vmatpush.msra.mxu0 %v264
    %442 = vmatpush.msra.mxu0 %v260
    %443 = vmatpush.msra.mxu0 %v256
    %444 = vmatpush.msra.mxu0 %v252
    %445 = vmatpush.msra.mxu0 %v248
    %446 = vmatpush.msra.mxu0 %v244
    %447 = vmatpush.msra.mxu0 %v240
    %448 = vmatpush.msra.mxu0 %v236
    %449 = vmatpush.msra.mxu0 %v232
    %450 = vmatpush.msra.mxu0 %v228
    %451 = vmatpush.msra.mxu0 %v224
    %452 = vmatpush.msra.mxu0 %v220
    %453 = vmatmul.f32.gmra.mxu0 %v214
    %v454 = vpop.f32.mrf.mxu0
    %v455 = vadd.f32 %v306, %v454
    %456 = vmatmul.f32.gmra.mxu0 %v215
    %v457 = vpop.f32.mrf.mxu0
    %v458 = vadd.f32 %v306, %v457
    %459 = vmatmul.f32.gmra.mxu0 %v216
    %v460 = vpop.f32.mrf.mxu0
    %v461 = vadd.f32 %v306, %v460
    %462 = vmatmul.f32.gmra.mxu0 %v217
    %v463 = vpop.f32.mrf.mxu0
    %v464 = vadd.f32 %v306, %v463
    %465 = vdwg.mxu0
    %466 = vmatpush.msra.mxu0 0.0
    %467 = vmatpush.msra.mxu0 0.0
    %468 = vmatpush.msra.mxu0 0.0
    %469 = vmatpush.msra.mxu0 0.0
    %470 = vmatpush.msra.mxu0 0.0
    %471 = vmatpush.msra.mxu0 0.0
    %472 = vmatpush.msra.mxu0 0.0
    %473 = vmatpush.msra.mxu0 0.0
    %474 = vmatpush.msra.mxu0 0.0
    %475 = vmatpush.msra.mxu0 0.0
    %476 = vmatpush.msra.mxu0 0.0
    %477 = vmatpush.msra.mxu0 %v300
    %478 = vmatpush.msra.mxu0 %v296
    %479 = vmatpush.msra.mxu0 %v292
    %480 = vmatpush.msra.mxu0 %v288
    %481 = vmatpush.msra.mxu0 %v284
    %482 = vmatmul.f32.gmra.mxu0 %v313
    %v483 = vpop.f32.mrf.mxu0
    %v484 = vadd.f32 %v455, %v483
    %485 = vmatmul.f32.gmra.mxu0 %v315
    %v486 = vpop.f32.mrf.mxu0
    %v487 = vadd.f32 %v458, %v486
    %488 = vmatmul.f32.gmra.mxu0 %v317
    %v489 = vpop.f32.mrf.mxu0
    %v490 = vadd.f32 %v461, %v489
    %491 = vmatmul.f32.gmra.mxu0 %v319
    %v492 = vpop.f32.mrf.mxu0
    %v493 = vadd.f32 %v464, %v492
    %494 = vdwg.mxu0
    %495 = vmatpush.msra.mxu0 %v281
    %496 = vmatpush.msra.mxu0 %v277
    %497 = vmatpush.msra.mxu0 %v273
    %498 = vmatpush.msra.mxu0 %v269
    %499 = vmatpush.msra.mxu0 %v265
    %500 = vmatpush.msra.mxu0 %v261
    %501 = vmatpush.msra.mxu0 %v257
    %502 = vmatpush.msra.mxu0 %v253
    %503 = vmatpush.msra.mxu0 %v249
    %504 = vmatpush.msra.mxu0 %v245
    %505 = vmatpush.msra.mxu0 %v241
    %506 = vmatpush.msra.mxu0 %v237
    %507 = vmatpush.msra.mxu0 %v233
    %508 = vmatpush.msra.mxu0 %v229
    %509 = vmatpush.msra.mxu0 %v225
    %510 = vmatpush.msra.mxu0 %v221
    %511 = vmatmul.f32.gmra.mxu0 %v214
    %v512 = vpop.f32.mrf.mxu0
    %v513 = vadd.f32 %v307, %v512
    %514 = vmatmul.f32.gmra.mxu0 %v215
    %v515 = vpop.f32.mrf.mxu0
    %v516 = vadd.f32 %v307, %v515
    %517 = vmatmul.f32.gmra.mxu0 %v216
    %v518 = vpop.f32.mrf.mxu0
    %v519 = vadd.f32 %v307, %v518
    %520 = vmatmul.f32.gmra.mxu0 %v217
    %v521 = vpop.f32.mrf.mxu0
    %v522 = vadd.f32 %v307, %v521
    %523 = vdwg.mxu0
    %524 = vmatpush.msra.mxu0 0.0
    %525 = vmatpush.msra.mxu0 0.0
    %526 = vmatpush.msra.mxu0 0.0
    %527 = vmatpush.msra.mxu0 0.0
    %528 = vmatpush.msra.mxu0 0.0
    %529 = vmatpush.msra.mxu0 0.0
    %530 = vmatpush.msra.mxu0 0.0
    %531 = vmatpush.msra.mxu0 0.0
    %532 = vmatpush.msra.mxu0 0.0
    %533 = vmatpush.msra.mxu0 0.0
    %534 = vmatpush.msra.mxu0 0.0
    %535 = vmatpush.msra.mxu0 %v301
    %536 = vmatpush.msra.mxu0 %v297
    %537 = vmatpush.msra.mxu0 %v293
    %538 = vmatpush.msra.mxu0 %v289
    %539 = vmatpush.msra.mxu0 %v285
    %540 = vmatmul.f32.gmra.mxu0 %v313
    %v541 = vpop.f32.mrf.mxu0
    %v542 = vadd.f32 %v513, %v541
    %543 = vmatmul.f32.gmra.mxu0 %v315
    %v544 = vpop.f32.mrf.mxu0
    %v545 = vadd.f32 %v516, %v544
    %546 = vmatmul.f32.gmra.mxu0 %v317
    %v547 = vpop.f32.mrf.mxu0
    %v548 = vadd.f32 %v519, %v547
    %549 = vmatmul.f32.gmra.mxu0 %v319
    %v550 = vpop.f32.mrf.mxu0
    %v551 = vadd.f32 %v522, %v550
    %552 = vdwg.mxu0
    %565 = vrot.lane.b32.xlu0 %v426, 16
    %v566 = vpop.permute.xlu0 %565
    %567 = vrot.lane.b32.xlu0 %v484, 16
    %v568 = vpop.permute.xlu0 %567
    %569 = vrot.lane.b32.xlu0 %v542, 16
    %v570 = vpop.permute.xlu0 %569
    %571 = vrot.lane.b32.xlu0 %v429, 16
    %v572 = vpop.permute.xlu0 %571
    %573 = vrot.lane.b32.xlu0 %v487, 16
    %v574 = vpop.permute.xlu0 %573
    %575 = vrot.lane.b32.xlu0 %v545, 16
    %v576 = vpop.permute.xlu0 %575
    %577 = vrot.lane.b32.xlu0 %v432, 16
    %v578 = vpop.permute.xlu0 %577
    %579 = vrot.lane.b32.xlu0 %v490, 16
    %v580 = vpop.permute.xlu0 %579
    %581 = vrot.lane.b32.xlu0 %v548, 16
    %v582 = vpop.permute.xlu0 %581
    %583 = vrot.lane.b32.xlu0 %v435, 16
    %v584 = vpop.permute.xlu0 %583
    %585 = vrot.lane.b32.xlu0 %v493, 16
    %v586 = vpop.permute.xlu0 %585
    %587 = vrot.lane.b32.xlu0 %v551, 16
    %v588 = vpop.permute.xlu0 %587
    %vm589 = vcmask 130048
    %v590 = vsel %vm589, %v566, %v568
    %v591 = vsel %vm589, %v568, %v570
    %v592 = vsel %vm589, %v572, %v574
    %v593 = vsel %vm589, %v574, %v576
    %v594 = vsel %vm589, %v578, %v580
    %v595 = vsel %vm589, %v580, %v582
    %v596 = vsel %vm589, %v584, %v586
    %v597 = vsel %vm589, %v586, %v588
    %v606 = vmax.f32 %v368, %v590
    %v607 = vmax.f32 %v426, %v591
    %v608 = vmax.f32 %v371, %v592
    %v609 = vmax.f32 %v429, %v593
    %v610 = vmax.f32 %v374, %v594
    %v611 = vmax.f32 %v432, %v595
    %v612 = vmax.f32 %v377, %v596
    %v613 = vmax.f32 %v435, %v597
    %622 = vrot.lane.b32.xlu0 %v606, 118
    %v623 = vpop.permute.xlu0 %622
    %624 = vrot.lane.b32.xlu0 %v607, 118
    %v625 = vpop.permute.xlu0 %624
    %626 = vrot.lane.b32.xlu0 %v608, 118
    %v627 = vpop.permute.xlu0 %626
    %628 = vrot.lane.b32.xlu0 %v609, 118
    %v629 = vpop.permute.xlu0 %628
    %630 = vrot.lane.b32.xlu0 %v610, 118
    %v631 = vpop.permute.xlu0 %630
    %632 = vrot.lane.b32.xlu0 %v611, 118
    %v633 = vpop.permute.xlu0 %632
    %634 = vrot.lane.b32.xlu0 %v612, 118
    %v635 = vpop.permute.xlu0 %634
    %636 = vrot.lane.b32.xlu0 %v613, 118
    %v637 = vpop.permute.xlu0 %636
    %vm638 = vcmask 965632
    %v639 = vsel %vm638, %v623, %v625
    %v640 = vsel %vm638, %v627, %v629
    %v641 = vsel %vm638, %v631, %v633
    %v642 = vsel %vm638, %v635, %v637
    %v651 = vmax.f32 %v606, %v639
    %v652 = vmax.f32 %v607, %v625
    %v653 = vmax.f32 %v608, %v640
    %v654 = vmax.f32 %v609, %v629
    %v655 = vmax.f32 %v610, %v641
    %v656 = vmax.f32 %v611, %v633
    %v657 = vmax.f32 %v612, %v642
    %v658 = vmax.f32 %v613, %v637
    %v659 = vmax.f32 %v651, 0.0
    %v660 = vmax.f32 %v652, 0.0
    %v661 = vmax.f32 %v653, 0.0
    %v662 = vmax.f32 %v654, 0.0
    %v663 = vmax.f32 %v655, 0.0
    %v664 = vmax.f32 %v656, 0.0
    %v665 = vmax.f32 %v657, 0.0
    %v666 = vmax.f32 %v658, 0.0
    %v667 = vld [vmem:[#allocation7] sm:$0xff]
    %v668 = vld [vmem:[#allocation7 + $0x8] sm:$0xff]
    %v669 = vld [vmem:[#allocation7 + $0x10] sm:$0xff]
    %v670 = vld [vmem:[#allocation7 + $0x18] sm:$0xff]
    %v671 = vld [vmem:[#allocation7 + $0x20] sm:$0xff]
    %v672 = vld [vmem:[#allocation7 + $0x28] sm:$0xff]
    %v673 = vld [vmem:[#allocation7 + $0x30] sm:$0xff]
    %v674 = vld [vmem:[#allocation7 + $0x38] sm:$0xff]
    %v675 = vld [vmem:[#allocation7 + $0x40] sm:$0xff]
    %v676 = vld [vmem:[#allocation7 + $0x48] sm:$0xff]
    %v677 = vld [vmem:[#allocation7 + $0x50] sm:$0xff]
    %v678 = vld [vmem:[#allocation7 + $0x58] sm:$0xff]
    %v679 = vld [vmem:[#allocation7 + $0x60] sm:$0xff]
    %v680 = vld [vmem:[#allocation7 + $0x68] sm:$0xff]
    %v681 = vld [vmem:[#allocation7 + $0x70] sm:$0xff]
    %v682 = vld [vmem:[#allocation7 + $0x78] sm:$0xff]
    %v683 = vld [vmem:[#allocation7 + $0x80] sm:$0xff]
    %v684 = vld [vmem:[#allocation7 + $0x88] sm:$0xff]
    %v685 = vld [vmem:[#allocation7 + $0x90] sm:$0xff]
    %v686 = vld [vmem:[#allocation7 + $0x98] sm:$0xff]
    %v687 = vld [vmem:[#allocation7 + $0xa0] sm:$0xff]
    %v688 = vld [vmem:[#allocation7 + $0xa8] sm:$0xff]
    %v689 = vld [vmem:[#allocation7 + $0xb0] sm:$0xff]
    %v690 = vld [vmem:[#allocation7 + $0xb8] sm:$0xff]
    %v691 = vld [vmem:[#allocation7 + $0xc0] sm:$0xff]
    %v692 = vld [vmem:[#allocation7 + $0xc8] sm:$0xff]
    %v693 = vld [vmem:[#allocation7 + $0xd0] sm:$0xff]
    %v694 = vld [vmem:[#allocation7 + $0xd8] sm:$0xff]
    %v695 = vld [vmem:[#allocation7 + $0xe0] sm:$0xff]
    %v696 = vld [vmem:[#allocation7 + $0xe8] sm:$0xff]
    %v697 = vld [vmem:[#allocation7 + $0xf0] sm:$0xff]
    %v698 = vld [vmem:[#allocation7 + $0xf8] sm:$0xff]
    %v699 = vld [vmem:[#allocation7 + $0x100] sm:$0xff]
    %v700 = vld [vmem:[#allocation7 + $0x108] sm:$0xff]
    %v701 = vld [vmem:[#allocation7 + $0x110] sm:$0xff]
    %v702 = vld [vmem:[#allocation7 + $0x118] sm:$0xff]
    %v703 = vld [vmem:[#allocation7 + $0x120] sm:$0xff]
    %v704 = vld [vmem:[#allocation7 + $0x128] sm:$0xff]
    %v705 = vld [vmem:[#allocation7 + $0x130] sm:$0xff]
    %v706 = vld [vmem:[#allocation7 + $0x138] sm:$0xff]
    %v707 = vld [vmem:[#allocation7 + $0x140] sm:$0xff]
    %v708 = vld [vmem:[#allocation7 + $0x148] sm:$0xff]
    %v709 = vld [vmem:[#allocation7 + $0x150] sm:$0xff]
    %v710 = vld [vmem:[#allocation7 + $0x158] sm:$0xff]
    %v711 = vld [vmem:[#allocation7 + $0x160] sm:$0xff]
    %v712 = vld [vmem:[#allocation7 + $0x168] sm:$0xff]
    %v713 = vld [vmem:[#allocation7 + $0x170] sm:$0xff]
    %v714 = vld [vmem:[#allocation7 + $0x178] sm:$0xff]
    %v715 = vld [vmem:[#allocation7 + $0x180] sm:$0xff]
    %v716 = vld [vmem:[#allocation7 + $0x188] sm:$0xff]
    %v717 = vld [vmem:[#allocation7 + $0x190] sm:$0xff]
    %v718 = vld [vmem:[#allocation7 + $0x198] sm:$0xff]
    %v719 = vld [vmem:[#allocation7 + $0x1a0] sm:$0xff]
    %v720 = vld [vmem:[#allocation7 + $0x1a8] sm:$0xff]
    %v721 = vld [vmem:[#allocation7 + $0x1b0] sm:$0xff]
    %v722 = vld [vmem:[#allocation7 + $0x1b8] sm:$0xff]
    %v723 = vld [vmem:[#allocation7 + $0x1c0] sm:$0x3f]
    %v724 = vld [vmem:[#allocation7 + $0x1c8] sm:$0x3f]
    %v733 = vrot.slane %v659, 1
    %v734 = vrot.slane %v661, 1
    %v735 = vsel %vm162, %v733, %v734
    %v736 = vrot.slane %v660, 1
    %v737 = vrot.slane %v662, 1
    %v738 = vsel %vm162, %v736, %v737
    %v739 = vrot.slane %v663, 1
    %v740 = vrot.slane %v665, 1
    %v741 = vsel %vm162, %v739, %v740
    %v742 = vrot.slane %v664, 1
    %v743 = vrot.slane %v666, 1
    %v744 = vsel %vm162, %v742, %v743
    %s747 = scalar_lea.vmem [#allocation7], 464
    %v748 = vld [vmem:[%s747] sm:$0xff]
    %v749 = vld [vmem:[%s747 + $0x8] sm:$0xff]
    %v750 = vld [vmem:[%s747 + $0x10] sm:$0xff]
    %v751 = vld [vmem:[%s747 + $0x18] sm:$0xff]
    %v752 = vld [vmem:[%s747 + $0x20] sm:$0xff]
    %v753 = vld [vmem:[%s747 + $0x28] sm:$0xff]
    %v754 = vld [vmem:[%s747 + $0x30] sm:$0xff]
    %v755 = vld [vmem:[%s747 + $0x38] sm:$0xff]
    %v756 = vld [vmem:[%s747 + $0x40] sm:$0xff]
    %v757 = vld [vmem:[%s747 + $0x48] sm:$0xff]
    %v758 = vld [vmem:[%s747 + $0x50] sm:$0xff]
    %v759 = vld [vmem:[%s747 + $0x58] sm:$0xff]
    %v760 = vld [vmem:[%s747 + $0x60] sm:$0xff]
    %v761 = vld [vmem:[%s747 + $0x68] sm:$0xff]
    %v762 = vld [vmem:[%s747 + $0x70] sm:$0xff]
    %v763 = vld [vmem:[%s747 + $0x78] sm:$0xff]
    %v764 = vld [vmem:[%s747 + $0x80] sm:$0xff]
    %v765 = vld [vmem:[%s747 + $0x88] sm:$0xff]
    %v766 = vld [vmem:[%s747 + $0x90] sm:$0xff]
    %v767 = vld [vmem:[%s747 + $0x98] sm:$0xff]
    %v768 = vld [vmem:[%s747 + $0xa0] sm:$0xff]
    %v769 = vld [vmem:[%s747 + $0xa8] sm:$0xff]
    %v770 = vld [vmem:[%s747 + $0xb0] sm:$0xff]
    %v771 = vld [vmem:[%s747 + $0xb8] sm:$0xff]
    %v772 = vld [vmem:[%s747 + $0xc0] sm:$0xff]
    %v773 = vld [vmem:[%s747 + $0xc8] sm:$0xff]
    %v774 = vld [vmem:[%s747 + $0xd0] sm:$0xff]
    %v775 = vld [vmem:[%s747 + $0xd8] sm:$0xff]
    %v776 = vld [vmem:[%s747 + $0xe0] sm:$0xff]
    %v777 = vld [vmem:[%s747 + $0xe8] sm:$0xff]
    %v778 = vld [vmem:[%s747 + $0xf0] sm:$0xff]
    %v779 = vld [vmem:[%s747 + $0xf8] sm:$0xff]
    %v780 = vld [vmem:[%s747 + $0x100] sm:$0xff]
    %v781 = vld [vmem:[%s747 + $0x108] sm:$0xff]
    %v782 = vld [vmem:[%s747 + $0x110] sm:$0xff]
    %v783 = vld [vmem:[%s747 + $0x118] sm:$0xff]
    %v784 = vld [vmem:[%s747 + $0x120] sm:$0xff]
    %v785 = vld [vmem:[%s747 + $0x128] sm:$0xff]
    %v786 = vld [vmem:[%s747 + $0x130] sm:$0xff]
    %v787 = vld [vmem:[%s747 + $0x138] sm:$0xff]
    %v788 = vld [vmem:[%s747 + $0x140] sm:$0xff]
    %v789 = vld [vmem:[%s747 + $0x148] sm:$0xff]
    %v790 = vld [vmem:[%s747 + $0x150] sm:$0xff]
    %v791 = vld [vmem:[%s747 + $0x158] sm:$0xff]
    %v792 = vld [vmem:[%s747 + $0x160] sm:$0xff]
    %v793 = vld [vmem:[%s747 + $0x168] sm:$0xff]
    %v794 = vld [vmem:[%s747 + $0x170] sm:$0xff]
    %v795 = vld [vmem:[%s747 + $0x178] sm:$0xff]
    %v796 = vld [vmem:[%s747 + $0x180] sm:$0xff]
    %v797 = vld [vmem:[%s747 + $0x188] sm:$0xff]
    %v798 = vld [vmem:[%s747 + $0x190] sm:$0xff]
    %v799 = vld [vmem:[%s747 + $0x198] sm:$0xff]
    %v800 = vld [vmem:[%s747 + $0x1a0] sm:$0xff]
    %v801 = vld [vmem:[%s747 + $0x1a8] sm:$0xff]
    %v802 = vld [vmem:[%s747 + $0x1b0] sm:$0xff]
    %v803 = vld [vmem:[%s747 + $0x1b8] sm:$0xff]
    %v804 = vld [vmem:[%s747 + $0x1c0] sm:$0x3f]
    %v805 = vld [vmem:[%s747 + $0x1c8] sm:$0x3f]
    %vm806 = vcmask 834560
    %v807 = vsel %vm806, %v738, 0
    %v809 = vsel %vm806, %v744, 0
    %v812 = vsel %vm185, %v804, 0
    %v815 = vsel %vm185, %v805, 0
    %817 = vmatpush.msra.mxu0 %v778
    %818 = vmatpush.msra.mxu0 %v776
    %819 = vmatpush.msra.mxu0 %v774
    %820 = vmatpush.msra.mxu0 %v772
    %821 = vmatpush.msra.mxu0 %v770
    %822 = vmatpush.msra.mxu0 %v768
    %823 = vmatpush.msra.mxu0 %v766
    %824 = vmatpush.msra.mxu0 %v764
    %825 = vmatpush.msra.mxu0 %v762
    %826 = vmatpush.msra.mxu0 %v760
    %827 = vmatpush.msra.mxu0 %v758
    %828 = vmatpush.msra.mxu0 %v756
    %829 = vmatpush.msra.mxu0 %v754
    %830 = vmatpush.msra.mxu0 %v752
    %831 = vmatpush.msra.mxu0 %v750
    %832 = vmatpush.msra.mxu0 %v748
    %833 = vmatmul.f32.gmra.mxu0 %v735
    %v834 = vpop.f32.mrf.mxu0
    %v835 = vadd.f32 0.0, %v834
    %836 = vmatmul.f32.gmra.mxu0 %v741
    %v837 = vpop.f32.mrf.mxu0
    %v838 = vadd.f32 0.0, %v837
    %839 = vdwg.mxu0
    %840 = vmatpush.msra.mxu0 0.0
    %841 = vmatpush.msra.mxu0 0.0
    %842 = vmatpush.msra.mxu0 0.0
    %843 = vmatpush.msra.mxu0 %v812
    %844 = vmatpush.msra.mxu0 %v802
    %845 = vmatpush.msra.mxu0 %v800
    %846 = vmatpush.msra.mxu0 %v798
    %847 = vmatpush.msra.mxu0 %v796
    %848 = vmatpush.msra.mxu0 %v794
    %849 = vmatpush.msra.mxu0 %v792
    %850 = vmatpush.msra.mxu0 %v790
    %851 = vmatpush.msra.mxu0 %v788
    %852 = vmatpush.msra.mxu0 %v786
    %853 = vmatpush.msra.mxu0 %v784
    %854 = vmatpush.msra.mxu0 %v782
    %855 = vmatpush.msra.mxu0 %v780
    %856 = vmatmul.f32.gmra.mxu0 %v807
    %v857 = vpop.f32.mrf.mxu0
    %v858 = vadd.f32 %v835, %v857
    %859 = vmatmul.f32.gmra.mxu0 %v809
    %v860 = vpop.f32.mrf.mxu0
    %v861 = vadd.f32 %v838, %v860
    %862 = vdwg.mxu0
    %863 = vmatpush.msra.mxu0 %v779
    %864 = vmatpush.msra.mxu0 %v777
    %865 = vmatpush.msra.mxu0 %v775
    %866 = vmatpush.msra.mxu0 %v773
    %867 = vmatpush.msra.mxu0 %v771
    %868 = vmatpush.msra.mxu0 %v769
    %869 = vmatpush.msra.mxu0 %v767
    %870 = vmatpush.msra.mxu0 %v765
    %871 = vmatpush.msra.mxu0 %v763
    %872 = vmatpush.msra.mxu0 %v761
    %873 = vmatpush.msra.mxu0 %v759
    %874 = vmatpush.msra.mxu0 %v757
    %875 = vmatpush.msra.mxu0 %v755
    %876 = vmatpush.msra.mxu0 %v753
    %877 = vmatpush.msra.mxu0 %v751
    %878 = vmatpush.msra.mxu0 %v749
    %879 = vmatmul.f32.gmra.mxu0 %v735
    %v880 = vpop.f32.mrf.mxu0
    %v881 = vadd.f32 0.0, %v880
    %882 = vmatmul.f32.gmra.mxu0 %v741
    %v883 = vpop.f32.mrf.mxu0
    %v884 = vadd.f32 0.0, %v883
    %885 = vdwg.mxu0
    %886 = vmatpush.msra.mxu0 0.0
    %887 = vmatpush.msra.mxu0 0.0
    %888 = vmatpush.msra.mxu0 0.0
    %889 = vmatpush.msra.mxu0 %v815
    %890 = vmatpush.msra.mxu0 %v803
    %891 = vmatpush.msra.mxu0 %v801
    %892 = vmatpush.msra.mxu0 %v799
    %893 = vmatpush.msra.mxu0 %v797
    %894 = vmatpush.msra.mxu0 %v795
    %895 = vmatpush.msra.mxu0 %v793
    %896 = vmatpush.msra.mxu0 %v791
    %897 = vmatpush.msra.mxu0 %v789
    %898 = vmatpush.msra.mxu0 %v787
    %899 = vmatpush.msra.mxu0 %v785
    %900 = vmatpush.msra.mxu0 %v783
    %901 = vmatpush.msra.mxu0 %v781
    %902 = vmatmul.f32.gmra.mxu0 %v807
    %v903 = vpop.f32.mrf.mxu0
    %v904 = vadd.f32 %v881, %v903
    %905 = vmatmul.f32.gmra.mxu0 %v809
    %v906 = vpop.f32.mrf.mxu0
    %v907 = vadd.f32 %v884, %v906
    %908 = vdwg.mxu0
    %v909 = vsel %vm806, %v660, 0
    %v911 = vsel %vm806, %v664, 0
    %v914 = vsel %vm185, %v723, 0
    %v917 = vsel %vm185, %v724, 0
    %919 = vmatpush.msra.mxu0 %v697
    %920 = vmatpush.msra.mxu0 %v695
    %921 = vmatpush.msra.mxu0 %v693
    %922 = vmatpush.msra.mxu0 %v691
    %923 = vmatpush.msra.mxu0 %v689
    %924 = vmatpush.msra.mxu0 %v687
    %925 = vmatpush.msra.mxu0 %v685
    %926 = vmatpush.msra.mxu0 %v683
    %927 = vmatpush.msra.mxu0 %v681
    %928 = vmatpush.msra.mxu0 %v679
    %929 = vmatpush.msra.mxu0 %v677
    %930 = vmatpush.msra.mxu0 %v675
    %931 = vmatpush.msra.mxu0 %v673
    %932 = vmatpush.msra.mxu0 %v671
    %933 = vmatpush.msra.mxu0 %v669
    %934 = vmatpush.msra.mxu0 %v667
    %935 = vmatmul.f32.gmra.mxu0 %v659
    %v936 = vpop.f32.mrf.mxu0
    %v937 = vadd.f32 %v858, %v936
    %938 = vmatmul.f32.gmra.mxu0 %v663
    %v939 = vpop.f32.mrf.mxu0
    %v940 = vadd.f32 %v861, %v939
    %941 = vdwg.mxu0
    %942 = vmatpush.msra.mxu0 0.0
    %943 = vmatpush.msra.mxu0 0.0
    %944 = vmatpush.msra.mxu0 0.0
    %945 = vmatpush.msra.mxu0 %v914
    %946 = vmatpush.msra.mxu0 %v721
    %947 = vmatpush.msra.mxu0 %v719
    %948 = vmatpush.msra.mxu0 %v717
    %949 = vmatpush.msra.mxu0 %v715
    %950 = vmatpush.msra.mxu0 %v713
    %951 = vmatpush.msra.mxu0 %v711
    %952 = vmatpush.msra.mxu0 %v709
    %953 = vmatpush.msra.mxu0 %v707
    %954 = vmatpush.msra.mxu0 %v705
    %955 = vmatpush.msra.mxu0 %v703
    %956 = vmatpush.msra.mxu0 %v701
    %957 = vmatpush.msra.mxu0 %v699
    %958 = vmatmul.f32.gmra.mxu0 %v909
    %v959 = vpop.f32.mrf.mxu0
    %v960 = vadd.f32 %v937, %v959
    %961 = vmatmul.f32.gmra.mxu0 %v911
    %v962 = vpop.f32.mrf.mxu0
    %v963 = vadd.f32 %v940, %v962
    %964 = vdwg.mxu0
    %965 = vmatpush.msra.mxu0 %v698
    %966 = vmatpush.msra.mxu0 %v696
    %967 = vmatpush.msra.mxu0 %v694
    %968 = vmatpush.msra.mxu0 %v692
    %969 = vmatpush.msra.mxu0 %v690
    %970 = vmatpush.msra.mxu0 %v688
    %971 = vmatpush.msra.mxu0 %v686
    %972 = vmatpush.msra.mxu0 %v684
    %973 = vmatpush.msra.mxu0 %v682
    %974 = vmatpush.msra.mxu0 %v680
    %975 = vmatpush.msra.mxu0 %v678
    %976 = vmatpush.msra.mxu0 %v676
    %977 = vmatpush.msra.mxu0 %v674
    %978 = vmatpush.msra.mxu0 %v672
    %979 = vmatpush.msra.mxu0 %v670
    %980 = vmatpush.msra.mxu0 %v668
    %981 = vmatmul.f32.gmra.mxu0 %v659
    %v982 = vpop.f32.mrf.mxu0
    %v983 = vadd.f32 %v904, %v982
    %984 = vmatmul.f32.gmra.mxu0 %v663
    %v985 = vpop.f32.mrf.mxu0
    %v986 = vadd.f32 %v907, %v985
    %987 = vdwg.mxu0
    %988 = vmatpush.msra.mxu0 0.0
    %989 = vmatpush.msra.mxu0 0.0
    %990 = vmatpush.msra.mxu0 0.0
    %991 = vmatpush.msra.mxu0 %v917
    %992 = vmatpush.msra.mxu0 %v722
    %993 = vmatpush.msra.mxu0 %v720
    %994 = vmatpush.msra.mxu0 %v718
    %995 = vmatpush.msra.mxu0 %v716
    %996 = vmatpush.msra.mxu0 %v714
    %997 = vmatpush.msra.mxu0 %v712
    %998 = vmatpush.msra.mxu0 %v710
    %999 = vmatpush.msra.mxu0 %v708
    %1000 = vmatpush.msra.mxu0 %v706
    %1001 = vmatpush.msra.mxu0 %v704
    %1002 = vmatpush.msra.mxu0 %v702
    %1003 = vmatpush.msra.mxu0 %v700
    %1004 = vmatmul.f32.gmra.mxu0 %v909
    %v1005 = vpop.f32.mrf.mxu0
    %v1006 = vadd.f32 %v983, %v1005
    %1007 = vmatmul.f32.gmra.mxu0 %v911
    %v1008 = vpop.f32.mrf.mxu0
    %v1009 = vadd.f32 %v986, %v1008
    %1010 = vdwg.mxu0
    %v1011 = vrot.slane %v659, 2
    %v1012 = vrot.slane %v661, 2
    %v1013 = vsel %vm185, %v1011, %v1012
    %v1014 = vrot.slane %v660, 2
    %v1015 = vrot.slane %v662, 2
    %v1016 = vsel %vm185, %v1014, %v1015
    %v1017 = vrot.slane %v663, 2
    %v1018 = vrot.slane %v665, 2
    %v1019 = vsel %vm185, %v1017, %v1018
    %v1020 = vrot.slane %v664, 2
    %v1021 = vrot.slane %v666, 2
    %v1022 = vsel %vm185, %v1020, %v1021
    %s1025 = scalar_lea.vmem [#allocation7], 928
    %v1026 = vld [vmem:[%s1025] sm:$0xff]
    %v1027 = vld [vmem:[%s1025 + $0x8] sm:$0xff]
    %v1028 = vld [vmem:[%s1025 + $0x10] sm:$0xff]
    %v1029 = vld [vmem:[%s1025 + $0x18] sm:$0xff]
    %v1030 = vld [vmem:[%s1025 + $0x20] sm:$0xff]
    %v1031 = vld [vmem:[%s1025 + $0x28] sm:$0xff]
    %v1032 = vld [vmem:[%s1025 + $0x30] sm:$0xff]
    %v1033 = vld [vmem:[%s1025 + $0x38] sm:$0xff]
    %v1034 = vld [vmem:[%s1025 + $0x40] sm:$0xff]
    %v1035 = vld [vmem:[%s1025 + $0x48] sm:$0xff]
    %v1036 = vld [vmem:[%s1025 + $0x50] sm:$0xff]
    %v1037 = vld [vmem:[%s1025 + $0x58] sm:$0xff]
    %v1038 = vld [vmem:[%s1025 + $0x60] sm:$0xff]
    %v1039 = vld [vmem:[%s1025 + $0x68] sm:$0xff]
    %v1040 = vld [vmem:[%s1025 + $0x70] sm:$0xff]
    %v1041 = vld [vmem:[%s1025 + $0x78] sm:$0xff]
    %v1042 = vld [vmem:[%s1025 + $0x80] sm:$0xff]
    %v1043 = vld [vmem:[%s1025 + $0x88] sm:$0xff]
    %v1044 = vld [vmem:[%s1025 + $0x90] sm:$0xff]
    %v1045 = vld [vmem:[%s1025 + $0x98] sm:$0xff]
    %v1046 = vld [vmem:[%s1025 + $0xa0] sm:$0xff]
    %v1047 = vld [vmem:[%s1025 + $0xa8] sm:$0xff]
    %v1048 = vld [vmem:[%s1025 + $0xb0] sm:$0xff]
    %v1049 = vld [vmem:[%s1025 + $0xb8] sm:$0xff]
    %v1050 = vld [vmem:[%s1025 + $0xc0] sm:$0xff]
    %v1051 = vld [vmem:[%s1025 + $0xc8] sm:$0xff]
    %v1052 = vld [vmem:[%s1025 + $0xd0] sm:$0xff]
    %v1053 = vld [vmem:[%s1025 + $0xd8] sm:$0xff]
    %v1054 = vld [vmem:[%s1025 + $0xe0] sm:$0xff]
    %v1055 = vld [vmem:[%s1025 + $0xe8] sm:$0xff]
    %v1056 = vld [vmem:[%s1025 + $0xf0] sm:$0xff]
    %v1057 = vld [vmem:[%s1025 + $0xf8] sm:$0xff]
    %v1058 = vld [vmem:[%s1025 + $0x100] sm:$0xff]
    %v1059 = vld [vmem:[%s1025 + $0x108] sm:$0xff]
    %v1060 = vld [vmem:[%s1025 + $0x110] sm:$0xff]
    %v1061 = vld [vmem:[%s1025 + $0x118] sm:$0xff]
    %v1062 = vld [vmem:[%s1025 + $0x120] sm:$0xff]
    %v1063 = vld [vmem:[%s1025 + $0x128] sm:$0xff]
    %v1064 = vld [vmem:[%s1025 + $0x130] sm:$0xff]
    %v1065 = vld [vmem:[%s1025 + $0x138] sm:$0xff]
    %v1066 = vld [vmem:[%s1025 + $0x140] sm:$0xff]
    %v1067 = vld [vmem:[%s1025 + $0x148] sm:$0xff]
    %v1068 = vld [vmem:[%s1025 + $0x150] sm:$0xff]
    %v1069 = vld [vmem:[%s1025 + $0x158] sm:$0xff]
    %v1070 = vld [vmem:[%s1025 + $0x160] sm:$0xff]
    %v1071 = vld [vmem:[%s1025 + $0x168] sm:$0xff]
    %v1072 = vld [vmem:[%s1025 + $0x170] sm:$0xff]
    %v1073 = vld [vmem:[%s1025 + $0x178] sm:$0xff]
    %v1074 = vld [vmem:[%s1025 + $0x180] sm:$0xff]
    %v1075 = vld [vmem:[%s1025 + $0x188] sm:$0xff]
    %v1076 = vld [vmem:[%s1025 + $0x190] sm:$0xff]
    %v1077 = vld [vmem:[%s1025 + $0x198] sm:$0xff]
    %v1078 = vld [vmem:[%s1025 + $0x1a0] sm:$0xff]
    %v1079 = vld [vmem:[%s1025 + $0x1a8] sm:$0xff]
    %v1080 = vld [vmem:[%s1025 + $0x1b0] sm:$0xff]
    %v1081 = vld [vmem:[%s1025 + $0x1b8] sm:$0xff]
    %v1082 = vld [vmem:[%s1025 + $0x1c0] sm:$0x3f]
    %v1083 = vld [vmem:[%s1025 + $0x1c8] sm:$0x3f]
    %v1084 = vsel %vm806, %v1016, 0
    %v1086 = vsel %vm806, %v1022, 0
    %v1089 = vsel %vm185, %v1082, 0
    %v1092 = vsel %vm185, %v1083, 0
    %1094 = vmatpush.msra.mxu0 %v1056
    %1095 = vmatpush.msra.mxu0 %v1054
    %1096 = vmatpush.msra.mxu0 %v1052
    %1097 = vmatpush.msra.mxu0 %v1050
    %1098 = vmatpush.msra.mxu0 %v1048
    %1099 = vmatpush.msra.mxu0 %v1046
    %1100 = vmatpush.msra.mxu0 %v1044
    %1101 = vmatpush.msra.mxu0 %v1042
    %1102 = vmatpush.msra.mxu0 %v1040
    %1103 = vmatpush.msra.mxu0 %v1038
    %1104 = vmatpush.msra.mxu0 %v1036
    %1105 = vmatpush.msra.mxu0 %v1034
    %1106 = vmatpush.msra.mxu0 %v1032
    %1107 = vmatpush.msra.mxu0 %v1030
    %1108 = vmatpush.msra.mxu0 %v1028
    %1109 = vmatpush.msra.mxu0 %v1026
    %1110 = vmatmul.f32.gmra.mxu0 %v1013
    %v1111 = vpop.f32.mrf.mxu0
    %v1112 = vadd.f32 0.0, %v1111
    %1113 = vmatmul.f32.gmra.mxu0 %v1019
    %v1114 = vpop.f32.mrf.mxu0
    %v1115 = vadd.f32 0.0, %v1114
    %1116 = vdwg.mxu0
    %1117 = vmatpush.msra.mxu0 0.0
    %1118 = vmatpush.msra.mxu0 0.0
    %1119 = vmatpush.msra.mxu0 0.0
    %1120 = vmatpush.msra.mxu0 %v1089
    %1121 = vmatpush.msra.mxu0 %v1080
    %1122 = vmatpush.msra.mxu0 %v1078
    %1123 = vmatpush.msra.mxu0 %v1076
    %1124 = vmatpush.msra.mxu0 %v1074
    %1125 = vmatpush.msra.mxu0 %v1072
    %1126 = vmatpush.msra.mxu0 %v1070
    %1127 = vmatpush.msra.mxu0 %v1068
    %1128 = vmatpush.msra.mxu0 %v1066
    %1129 = vmatpush.msra.mxu0 %v1064
    %1130 = vmatpush.msra.mxu0 %v1062
    %1131 = vmatpush.msra.mxu0 %v1060
    %1132 = vmatpush.msra.mxu0 %v1058
    %1133 = vmatmul.f32.gmra.mxu0 %v1084
    %v1134 = vpop.f32.mrf.mxu0
    %v1135 = vadd.f32 %v1112, %v1134
    %1136 = vmatmul.f32.gmra.mxu0 %v1086
    %v1137 = vpop.f32.mrf.mxu0
    %v1138 = vadd.f32 %v1115, %v1137
    %1139 = vdwg.mxu0
    %1140 = vmatpush.msra.mxu0 %v1057
    %1141 = vmatpush.msra.mxu0 %v1055
    %1142 = vmatpush.msra.mxu0 %v1053
    %1143 = vmatpush.msra.mxu0 %v1051
    %1144 = vmatpush.msra.mxu0 %v1049
    %1145 = vmatpush.msra.mxu0 %v1047
    %1146 = vmatpush.msra.mxu0 %v1045
    %1147 = vmatpush.msra.mxu0 %v1043
    %1148 = vmatpush.msra.mxu0 %v1041
    %1149 = vmatpush.msra.mxu0 %v1039
    %1150 = vmatpush.msra.mxu0 %v1037
    %1151 = vmatpush.msra.mxu0 %v1035
    %1152 = vmatpush.msra.mxu0 %v1033
    %1153 = vmatpush.msra.mxu0 %v1031
    %1154 = vmatpush.msra.mxu0 %v1029
    %1155 = vmatpush.msra.mxu0 %v1027
    %1156 = vmatmul.f32.gmra.mxu0 %v1013
    %v1157 = vpop.f32.mrf.mxu0
    %v1158 = vadd.f32 0.0, %v1157
    %1159 = vmatmul.f32.gmra.mxu0 %v1019
    %v1160 = vpop.f32.mrf.mxu0
    %v1161 = vadd.f32 0.0, %v1160
    %1162 = vdwg.mxu0
    %1163 = vmatpush.msra.mxu0 0.0
    %1164 = vmatpush.msra.mxu0 0.0
    %1165 = vmatpush.msra.mxu0 0.0
    %1166 = vmatpush.msra.mxu0 %v1092
    %1167 = vmatpush.msra.mxu0 %v1081
    %1168 = vmatpush.msra.mxu0 %v1079
    %1169 = vmatpush.msra.mxu0 %v1077
    %1170 = vmatpush.msra.mxu0 %v1075
    %1171 = vmatpush.msra.mxu0 %v1073
    %1172 = vmatpush.msra.mxu0 %v1071
    %1173 = vmatpush.msra.mxu0 %v1069
    %1174 = vmatpush.msra.mxu0 %v1067
    %1175 = vmatpush.msra.mxu0 %v1065
    %1176 = vmatpush.msra.mxu0 %v1063
    %1177 = vmatpush.msra.mxu0 %v1061
    %1178 = vmatpush.msra.mxu0 %v1059
    %1179 = vmatmul.f32.gmra.mxu0 %v1084
    %v1180 = vpop.f32.mrf.mxu0
    %v1181 = vadd.f32 %v1158, %v1180
    %1182 = vmatmul.f32.gmra.mxu0 %v1086
    %v1183 = vpop.f32.mrf.mxu0
    %v1184 = vadd.f32 %v1161, %v1183
    %1185 = vdwg.mxu0
    %v1186 = vadd.f32 %v960, %v1135
    %v1187 = vadd.f32 %v1006, %v1181
    %v1188 = vadd.f32 %v963, %v1138
    %v1189 = vadd.f32 %v1009, %v1184
    %vm1190 = vcmask 1044480
    %v1191 = vrot.slane %v659, 3
    %v1192 = vrot.slane %v661, 3
    %v1193 = vsel %vm1190, %v1191, %v1192
    %v1194 = vrot.slane %v660, 3
    %v1195 = vrot.slane %v662, 3
    %v1196 = vsel %vm1190, %v1194, %v1195
    %v1197 = vrot.slane %v663, 3
    %v1198 = vrot.slane %v665, 3
    %v1199 = vsel %vm1190, %v1197, %v1198
    %v1200 = vrot.slane %v664, 3
    %v1201 = vrot.slane %v666, 3
    %v1202 = vsel %vm1190, %v1200, %v1201
    %s1205 = scalar_lea.vmem [#allocation7], 1392
    %v1206 = vld [vmem:[%s1205] sm:$0xff]
    %v1207 = vld [vmem:[%s1205 + $0x8] sm:$0xff]
    %v1208 = vld [vmem:[%s1205 + $0x10] sm:$0xff]
    %v1209 = vld [vmem:[%s1205 + $0x18] sm:$0xff]
    %v1210 = vld [vmem:[%s1205 + $0x20] sm:$0xff]
    %v1211 = vld [vmem:[%s1205 + $0x28] sm:$0xff]
    %v1212 = vld [vmem:[%s1205 + $0x30] sm:$0xff]
    %v1213 = vld [vmem:[%s1205 + $0x38] sm:$0xff]
    %v1214 = vld [vmem:[%s1205 + $0x40] sm:$0xff]
    %v1215 = vld [vmem:[%s1205 + $0x48] sm:$0xff]
    %v1216 = vld [vmem:[%s1205 + $0x50] sm:$0xff]
    %v1217 = vld [vmem:[%s1205 + $0x58] sm:$0xff]
    %v1218 = vld [vmem:[%s1205 + $0x60] sm:$0xff]
    %v1219 = vld [vmem:[%s1205 + $0x68] sm:$0xff]
    %v1220 = vld [vmem:[%s1205 + $0x70] sm:$0xff]
    %v1221 = vld [vmem:[%s1205 + $0x78] sm:$0xff]
    %v1222 = vld [vmem:[%s1205 + $0x80] sm:$0xff]
    %v1223 = vld [vmem:[%s1205 + $0x88] sm:$0xff]
    %v1224 = vld [vmem:[%s1205 + $0x90] sm:$0xff]
    %v1225 = vld [vmem:[%s1205 + $0x98] sm:$0xff]
    %v1226 = vld [vmem:[%s1205 + $0xa0] sm:$0xff]
    %v1227 = vld [vmem:[%s1205 + $0xa8] sm:$0xff]
    %v1228 = vld [vmem:[%s1205 + $0xb0] sm:$0xff]
    %v1229 = vld [vmem:[%s1205 + $0xb8] sm:$0xff]
    %v1230 = vld [vmem:[%s1205 + $0xc0] sm:$0xff]
    %v1231 = vld [vmem:[%s1205 + $0xc8] sm:$0xff]
    %v1232 = vld [vmem:[%s1205 + $0xd0] sm:$0xff]
    %v1233 = vld [vmem:[%s1205 + $0xd8] sm:$0xff]
    %v1234 = vld [vmem:[%s1205 + $0xe0] sm:$0xff]
    %v1235 = vld [vmem:[%s1205 + $0xe8] sm:$0xff]
    %v1236 = vld [vmem:[%s1205 + $0xf0] sm:$0xff]
    %v1237 = vld [vmem:[%s1205 + $0xf8] sm:$0xff]
    %v1238 = vld [vmem:[%s1205 + $0x100] sm:$0xff]
    %v1239 = vld [vmem:[%s1205 + $0x108] sm:$0xff]
    %v1240 = vld [vmem:[%s1205 + $0x110] sm:$0xff]
    %v1241 = vld [vmem:[%s1205 + $0x118] sm:$0xff]
    %v1242 = vld [vmem:[%s1205 + $0x120] sm:$0xff]
    %v1243 = vld [vmem:[%s1205 + $0x128] sm:$0xff]
    %v1244 = vld [vmem:[%s1205 + $0x130] sm:$0xff]
    %v1245 = vld [vmem:[%s1205 + $0x138] sm:$0xff]
    %v1246 = vld [vmem:[%s1205 + $0x140] sm:$0xff]
    %v1247 = vld [vmem:[%s1205 + $0x148] sm:$0xff]
    %v1248 = vld [vmem:[%s1205 + $0x150] sm:$0xff]
    %v1249 = vld [vmem:[%s1205 + $0x158] sm:$0xff]
    %v1250 = vld [vmem:[%s1205 + $0x160] sm:$0xff]
    %v1251 = vld [vmem:[%s1205 + $0x168] sm:$0xff]
    %v1252 = vld [vmem:[%s1205 + $0x170] sm:$0xff]
    %v1253 = vld [vmem:[%s1205 + $0x178] sm:$0xff]
    %v1254 = vld [vmem:[%s1205 + $0x180] sm:$0xff]
    %v1255 = vld [vmem:[%s1205 + $0x188] sm:$0xff]
    %v1256 = vld [vmem:[%s1205 + $0x190] sm:$0xff]
    %v1257 = vld [vmem:[%s1205 + $0x198] sm:$0xff]
    %v1258 = vld [vmem:[%s1205 + $0x1a0] sm:$0xff]
    %v1259 = vld [vmem:[%s1205 + $0x1a8] sm:$0xff]
    %v1260 = vld [vmem:[%s1205 + $0x1b0] sm:$0xff]
    %v1261 = vld [vmem:[%s1205 + $0x1b8] sm:$0xff]
    %v1262 = vld [vmem:[%s1205 + $0x1c0] sm:$0x3f]
    %v1263 = vld [vmem:[%s1205 + $0x1c8] sm:$0x3f]
    %v1264 = vsel %vm806, %v1196, 0
    %v1266 = vsel %vm806, %v1202, 0
    %v1269 = vsel %vm185, %v1262, 0
    %v1272 = vsel %vm185, %v1263, 0
    %1274 = vmatpush.msra.mxu0 %v1236
    %1275 = vmatpush.msra.mxu0 %v1234
    %1276 = vmatpush.msra.mxu0 %v1232
    %1277 = vmatpush.msra.mxu0 %v1230
    %1278 = vmatpush.msra.mxu0 %v1228
    %1279 = vmatpush.msra.mxu0 %v1226
    %1280 = vmatpush.msra.mxu0 %v1224
    %1281 = vmatpush.msra.mxu0 %v1222
    %1282 = vmatpush.msra.mxu0 %v1220
    %1283 = vmatpush.msra.mxu0 %v1218
    %1284 = vmatpush.msra.mxu0 %v1216
    %1285 = vmatpush.msra.mxu0 %v1214
    %1286 = vmatpush.msra.mxu0 %v1212
    %1287 = vmatpush.msra.mxu0 %v1210
    %1288 = vmatpush.msra.mxu0 %v1208
    %1289 = vmatpush.msra.mxu0 %v1206
    %1290 = vmatmul.f32.gmra.mxu0 %v1193
    %v1291 = vpop.f32.mrf.mxu0
    %v1292 = vadd.f32 0.0, %v1291
    %1293 = vmatmul.f32.gmra.mxu0 %v1199
    %v1294 = vpop.f32.mrf.mxu0
    %v1295 = vadd.f32 0.0, %v1294
    %1296 = vdwg.mxu0
    %1297 = vmatpush.msra.mxu0 0.0
    %1298 = vmatpush.msra.mxu0 0.0
    %1299 = vmatpush.msra.mxu0 0.0
    %1300 = vmatpush.msra.mxu0 %v1269
    %1301 = vmatpush.msra.mxu0 %v1260
    %1302 = vmatpush.msra.mxu0 %v1258
    %1303 = vmatpush.msra.mxu0 %v1256
    %1304 = vmatpush.msra.mxu0 %v1254
    %1305 = vmatpush.msra.mxu0 %v1252
    %1306 = vmatpush.msra.mxu0 %v1250
    %1307 = vmatpush.msra.mxu0 %v1248
    %1308 = vmatpush.msra.mxu0 %v1246
    %1309 = vmatpush.msra.mxu0 %v1244
    %1310 = vmatpush.msra.mxu0 %v1242
    %1311 = vmatpush.msra.mxu0 %v1240
    %1312 = vmatpush.msra.mxu0 %v1238
    %1313 = vmatmul.f32.gmra.mxu0 %v1264
    %v1314 = vpop.f32.mrf.mxu0
    %v1315 = vadd.f32 %v1292, %v1314
    %1316 = vmatmul.f32.gmra.mxu0 %v1266
    %v1317 = vpop.f32.mrf.mxu0
    %v1318 = vadd.f32 %v1295, %v1317
    %1319 = vdwg.mxu0
    %1320 = vmatpush.msra.mxu0 %v1237
    %1321 = vmatpush.msra.mxu0 %v1235
    %1322 = vmatpush.msra.mxu0 %v1233
    %1323 = vmatpush.msra.mxu0 %v1231
    %1324 = vmatpush.msra.mxu0 %v1229
    %1325 = vmatpush.msra.mxu0 %v1227
    %1326 = vmatpush.msra.mxu0 %v1225
    %1327 = vmatpush.msra.mxu0 %v1223
    %1328 = vmatpush.msra.mxu0 %v1221
    %1329 = vmatpush.msra.mxu0 %v1219
    %1330 = vmatpush.msra.mxu0 %v1217
    %1331 = vmatpush.msra.mxu0 %v1215
    %1332 = vmatpush.msra.mxu0 %v1213
    %1333 = vmatpush.msra.mxu0 %v1211
    %1334 = vmatpush.msra.mxu0 %v1209
    %1335 = vmatpush.msra.mxu0 %v1207
    %1336 = vmatmul.f32.gmra.mxu0 %v1193
    %v1337 = vpop.f32.mrf.mxu0
    %v1338 = vadd.f32 0.0, %v1337
    %1339 = vmatmul.f32.gmra.mxu0 %v1199
    %v1340 = vpop.f32.mrf.mxu0
    %v1341 = vadd.f32 0.0, %v1340
    %1342 = vdwg.mxu0
    %1343 = vmatpush.msra.mxu0 0.0
    %1344 = vmatpush.msra.mxu0 0.0
    %1345 = vmatpush.msra.mxu0 0.0
    %1346 = vmatpush.msra.mxu0 %v1272
    %1347 = vmatpush.msra.mxu0 %v1261
    %1348 = vmatpush.msra.mxu0 %v1259
    %1349 = vmatpush.msra.mxu0 %v1257
    %1350 = vmatpush.msra.mxu0 %v1255
    %1351 = vmatpush.msra.mxu0 %v1253
    %1352 = vmatpush.msra.mxu0 %v1251
    %1353 = vmatpush.msra.mxu0 %v1249
    %1354 = vmatpush.msra.mxu0 %v1247
    %1355 = vmatpush.msra.mxu0 %v1245
    %1356 = vmatpush.msra.mxu0 %v1243
    %1357 = vmatpush.msra.mxu0 %v1241
    %1358 = vmatpush.msra.mxu0 %v1239
    %1359 = vmatmul.f32.gmra.mxu0 %v1264
    %v1360 = vpop.f32.mrf.mxu0
    %v1361 = vadd.f32 %v1338, %v1360
    %1362 = vmatmul.f32.gmra.mxu0 %v1266
    %v1363 = vpop.f32.mrf.mxu0
    %v1364 = vadd.f32 %v1341, %v1363
    %1365 = vdwg.mxu0
    %v1366 = vadd.f32 %v1186, %v1315
    %v1367 = vadd.f32 %v1187, %v1361
    %v1368 = vadd.f32 %v1188, %v1318
    %v1369 = vadd.f32 %v1189, %v1364
    %vm1370 = vcmask 1043456
    %v1371 = vrot.slane %v659, 4
    %v1372 = vrot.slane %v661, 4
    %v1373 = vsel %vm1370, %v1371, %v1372
    %v1374 = vrot.slane %v660, 4
    %v1375 = vrot.slane %v662, 4
    %v1376 = vsel %vm1370, %v1374, %v1375
    %v1377 = vrot.slane %v663, 4
    %v1378 = vrot.slane %v665, 4
    %v1379 = vsel %vm1370, %v1377, %v1378
    %v1380 = vrot.slane %v664, 4
    %v1381 = vrot.slane %v666, 4
    %v1382 = vsel %vm1370, %v1380, %v1381
    %s1385 = scalar_lea.vmem [#allocation7], 1856
    %v1386 = vld [vmem:[%s1385] sm:$0xff]
    %v1387 = vld [vmem:[%s1385 + $0x8] sm:$0xff]
    %v1388 = vld [vmem:[%s1385 + $0x10] sm:$0xff]
    %v1389 = vld [vmem:[%s1385 + $0x18] sm:$0xff]
    %v1390 = vld [vmem:[%s1385 + $0x20] sm:$0xff]
    %v1391 = vld [vmem:[%s1385 + $0x28] sm:$0xff]
    %v1392 = vld [vmem:[%s1385 + $0x30] sm:$0xff]
    %v1393 = vld [vmem:[%s1385 + $0x38] sm:$0xff]
    %v1394 = vld [vmem:[%s1385 + $0x40] sm:$0xff]
    %v1395 = vld [vmem:[%s1385 + $0x48] sm:$0xff]
    %v1396 = vld [vmem:[%s1385 + $0x50] sm:$0xff]
    %v1397 = vld [vmem:[%s1385 + $0x58] sm:$0xff]
    %v1398 = vld [vmem:[%s1385 + $0x60] sm:$0xff]
    %v1399 = vld [vmem:[%s1385 + $0x68] sm:$0xff]
    %v1400 = vld [vmem:[%s1385 + $0x70] sm:$0xff]
    %v1401 = vld [vmem:[%s1385 + $0x78] sm:$0xff]
    %v1402 = vld [vmem:[%s1385 + $0x80] sm:$0xff]
    %v1403 = vld [vmem:[%s1385 + $0x88] sm:$0xff]
    %v1404 = vld [vmem:[%s1385 + $0x90] sm:$0xff]
    %v1405 = vld [vmem:[%s1385 + $0x98] sm:$0xff]
    %v1406 = vld [vmem:[%s1385 + $0xa0] sm:$0xff]
    %v1407 = vld [vmem:[%s1385 + $0xa8] sm:$0xff]
    %v1408 = vld [vmem:[%s1385 + $0xb0] sm:$0xff]
    %v1409 = vld [vmem:[%s1385 + $0xb8] sm:$0xff]
    %v1410 = vld [vmem:[%s1385 + $0xc0] sm:$0xff]
    %v1411 = vld [vmem:[%s1385 + $0xc8] sm:$0xff]
    %v1412 = vld [vmem:[%s1385 + $0xd0] sm:$0xff]
    %v1413 = vld [vmem:[%s1385 + $0xd8] sm:$0xff]
    %v1414 = vld [vmem:[%s1385 + $0xe0] sm:$0xff]
    %v1415 = vld [vmem:[%s1385 + $0xe8] sm:$0xff]
    %v1416 = vld [vmem:[%s1385 + $0xf0] sm:$0xff]
    %v1417 = vld [vmem:[%s1385 + $0xf8] sm:$0xff]
    %v1418 = vld [vmem:[%s1385 + $0x100] sm:$0xff]
    %v1419 = vld [vmem:[%s1385 + $0x108] sm:$0xff]
    %v1420 = vld [vmem:[%s1385 + $0x110] sm:$0xff]
    %v1421 = vld [vmem:[%s1385 + $0x118] sm:$0xff]
    %v1422 = vld [vmem:[%s1385 + $0x120] sm:$0xff]
    %v1423 = vld [vmem:[%s1385 + $0x128] sm:$0xff]
    %v1424 = vld [vmem:[%s1385 + $0x130] sm:$0xff]
    %v1425 = vld [vmem:[%s1385 + $0x138] sm:$0xff]
    %v1426 = vld [vmem:[%s1385 + $0x140] sm:$0xff]
    %v1427 = vld [vmem:[%s1385 + $0x148] sm:$0xff]
    %v1428 = vld [vmem:[%s1385 + $0x150] sm:$0xff]
    %v1429 = vld [vmem:[%s1385 + $0x158] sm:$0xff]
    %v1430 = vld [vmem:[%s1385 + $0x160] sm:$0xff]
    %v1431 = vld [vmem:[%s1385 + $0x168] sm:$0xff]
    %v1432 = vld [vmem:[%s1385 + $0x170] sm:$0xff]
    %v1433 = vld [vmem:[%s1385 + $0x178] sm:$0xff]
    %v1434 = vld [vmem:[%s1385 + $0x180] sm:$0xff]
    %v1435 = vld [vmem:[%s1385 + $0x188] sm:$0xff]
    %v1436 = vld [vmem:[%s1385 + $0x190] sm:$0xff]
    %v1437 = vld [vmem:[%s1385 + $0x198] sm:$0xff]
    %v1438 = vld [vmem:[%s1385 + $0x1a0] sm:$0xff]
    %v1439 = vld [vmem:[%s1385 + $0x1a8] sm:$0xff]
    %v1440 = vld [vmem:[%s1385 + $0x1b0] sm:$0xff]
    %v1441 = vld [vmem:[%s1385 + $0x1b8] sm:$0xff]
    %v1442 = vld [vmem:[%s1385 + $0x1c0] sm:$0x3f]
    %v1443 = vld [vmem:[%s1385 + $0x1c8] sm:$0x3f]
    %v1444 = vsel %vm806, %v1376, 0
    %v1446 = vsel %vm806, %v1382, 0
    %v1449 = vsel %vm185, %v1442, 0
    %v1452 = vsel %vm185, %v1443, 0
    %1454 = vmatpush.msra.mxu0 %v1416
    %1455 = vmatpush.msra.mxu0 %v1414
    %1456 = vmatpush.msra.mxu0 %v1412
    %1457 = vmatpush.msra.mxu0 %v1410
    %1458 = vmatpush.msra.mxu0 %v1408
    %1459 = vmatpush.msra.mxu0 %v1406
    %1460 = vmatpush.msra.mxu0 %v1404
    %1461 = vmatpush.msra.mxu0 %v1402
    %1462 = vmatpush.msra.mxu0 %v1400
    %1463 = vmatpush.msra.mxu0 %v1398
    %1464 = vmatpush.msra.mxu0 %v1396
    %1465 = vmatpush.msra.mxu0 %v1394
    %1466 = vmatpush.msra.mxu0 %v1392
    %1467 = vmatpush.msra.mxu0 %v1390
    %1468 = vmatpush.msra.mxu0 %v1388
    %1469 = vmatpush.msra.mxu0 %v1386
    %1470 = vmatmul.f32.gmra.mxu0 %v1373
    %v1471 = vpop.f32.mrf.mxu0
    %v1472 = vadd.f32 0.0, %v1471
    %1473 = vmatmul.f32.gmra.mxu0 %v1379
    %v1474 = vpop.f32.mrf.mxu0
    %v1475 = vadd.f32 0.0, %v1474
    %1476 = vdwg.mxu0
    %1477 = vmatpush.msra.mxu0 0.0
    %1478 = vmatpush.msra.mxu0 0.0
    %1479 = vmatpush.msra.mxu0 0.0
    %1480 = vmatpush.msra.mxu0 %v1449
    %1481 = vmatpush.msra.mxu0 %v1440
    %1482 = vmatpush.msra.mxu0 %v1438
    %1483 = vmatpush.msra.mxu0 %v1436
    %1484 = vmatpush.msra.mxu0 %v1434
    %1485 = vmatpush.msra.mxu0 %v1432
    %1486 = vmatpush.msra.mxu0 %v1430
    %1487 = vmatpush.msra.mxu0 %v1428
    %1488 = vmatpush.msra.mxu0 %v1426
    %1489 = vmatpush.msra.mxu0 %v1424
    %1490 = vmatpush.msra.mxu0 %v1422
    %1491 = vmatpush.msra.mxu0 %v1420
    %1492 = vmatpush.msra.mxu0 %v1418
    %1493 = vmatmul.f32.gmra.mxu0 %v1444
    %v1494 = vpop.f32.mrf.mxu0
    %v1495 = vadd.f32 %v1472, %v1494
    %1496 = vmatmul.f32.gmra.mxu0 %v1446
    %v1497 = vpop.f32.mrf.mxu0
    %v1498 = vadd.f32 %v1475, %v1497
    %1499 = vdwg.mxu0
    %1500 = vmatpush.msra.mxu0 %v1417
    %1501 = vmatpush.msra.mxu0 %v1415
    %1502 = vmatpush.msra.mxu0 %v1413
    %1503 = vmatpush.msra.mxu0 %v1411
    %1504 = vmatpush.msra.mxu0 %v1409
    %1505 = vmatpush.msra.mxu0 %v1407
    %1506 = vmatpush.msra.mxu0 %v1405
    %1507 = vmatpush.msra.mxu0 %v1403
    %1508 = vmatpush.msra.mxu0 %v1401
    %1509 = vmatpush.msra.mxu0 %v1399
    %1510 = vmatpush.msra.mxu0 %v1397
    %1511 = vmatpush.msra.mxu0 %v1395
    %1512 = vmatpush.msra.mxu0 %v1393
    %1513 = vmatpush.msra.mxu0 %v1391
    %1514 = vmatpush.msra.mxu0 %v1389
    %1515 = vmatpush.msra.mxu0 %v1387
    %1516 = vmatmul.f32.gmra.mxu0 %v1373
    %v1517 = vpop.f32.mrf.mxu0
    %v1518 = vadd.f32 0.0, %v1517
    %1519 = vmatmul.f32.gmra.mxu0 %v1379
    %v1520 = vpop.f32.mrf.mxu0
    %v1521 = vadd.f32 0.0, %v1520
    %1522 = vdwg.mxu0
    %1523 = vmatpush.msra.mxu0 0.0
    %1524 = vmatpush.msra.mxu0 0.0
    %1525 = vmatpush.msra.mxu0 0.0
    %1526 = vmatpush.msra.mxu0 %v1452
    %1527 = vmatpush.msra.mxu0 %v1441
    %1528 = vmatpush.msra.mxu0 %v1439
    %1529 = vmatpush.msra.mxu0 %v1437
    %1530 = vmatpush.msra.mxu0 %v1435
    %1531 = vmatpush.msra.mxu0 %v1433
    %1532 = vmatpush.msra.mxu0 %v1431
    %1533 = vmatpush.msra.mxu0 %v1429
    %1534 = vmatpush.msra.mxu0 %v1427
    %1535 = vmatpush.msra.mxu0 %v1425
    %1536 = vmatpush.msra.mxu0 %v1423
    %1537 = vmatpush.msra.mxu0 %v1421
    %1538 = vmatpush.msra.mxu0 %v1419
    %1539 = vmatmul.f32.gmra.mxu0 %v1444
    %v1540 = vpop.f32.mrf.mxu0
    %v1541 = vadd.f32 %v1518, %v1540
    %1542 = vmatmul.f32.gmra.mxu0 %v1446
    %v1543 = vpop.f32.mrf.mxu0
    %v1544 = vadd.f32 %v1521, %v1543
    %1545 = vdwg.mxu0
    %v1546 = vadd.f32 %v1366, %v1495
    %v1547 = vadd.f32 %v1367, %v1541
    %v1548 = vadd.f32 %v1368, %v1498
    %v1549 = vadd.f32 %v1369, %v1544
    %v1550 = vld [vmem:[#allocation8] sm:$0x3]
    %v1552 = vperm.slane %v1550, 0
    %v1553 = vperm.slane %v1550, 1
    %v1556 = vadd.f32 %v1546, %v1552
    %v1557 = vadd.f32 %v1547, %v1553
    %v1558 = vadd.f32 %v1548, %v1552
    %v1559 = vadd.f32 %v1549, %v1553
    %1564 = vrot.lane.b32.xlu0 %v1556, 108
    %v1565 = vpop.permute.xlu0 %1564
    %1566 = vrot.lane.b32.xlu0 %v1557, 108
    %v1567 = vpop.permute.xlu0 %1566
    %1568 = vrot.lane.b32.xlu0 %v1558, 108
    %v1569 = vpop.permute.xlu0 %1568
    %1570 = vrot.lane.b32.xlu0 %v1559, 108
    %v1571 = vpop.permute.xlu0 %1570
    %vm1572 = vcmask 883712
    %v1573 = vsel %vm1572, %v1565, %v1567
    %v1574 = vsel %vm1572, %v1569, %v1571
    %v1579 = vmax.f32 %v1556, %v1573
    %v1580 = vmax.f32 %v1557, %v1567
    %v1581 = vmax.f32 %v1558, %v1574
    %v1582 = vmax.f32 %v1559, %v1571
    %v1587 = vrot.slane %v1579, 1
    %v1588 = vrot.slane %v1580, 1
    %v1589 = vrot.slane %v1581, 1
    %v1590 = vrot.slane %v1582, 1
    %v1595 = vmax.f32 %v1579, %v1587
    %v1596 = vmax.f32 %v1580, %v1588
    %v1597 = vmax.f32 %v1581, %v1589
    %v1598 = vmax.f32 %v1582, %v1590
    %v1599 = vmax.f32 %v1595, 0.0
    %v1600 = vmax.f32 %v1596, 0.0
    %v1601 = vmax.f32 %v1597, 0.0
    %v1602 = vmax.f32 %v1598, 0.0
    %v1603 = vld [vmem:[#allocation10] sm:$0xff]
    %v1604 = vld [vmem:[#allocation10 + $0x8] sm:$0xff]
    %v1605 = vld [vmem:[#allocation10 + $0x10] sm:$0xff]
    %v1606 = vld [vmem:[#allocation10 + $0x18] sm:$0xff]
    %v1607 = vld [vmem:[#allocation10 + $0x20] sm:$0xff]
    %v1608 = vld [vmem:[#allocation10 + $0x28] sm:$0xff]
    %v1609 = vld [vmem:[#allocation10 + $0x30] sm:$0xff]
    %v1610 = vld [vmem:[#allocation10 + $0x38] sm:$0xff]
    %v1611 = vld [vmem:[#allocation10 + $0x40] sm:$0xff]
    %v1612 = vld [vmem:[#allocation10 + $0x48] sm:$0xff]
    %v1613 = vld [vmem:[#allocation10 + $0x50] sm:$0xff]
    %v1614 = vld [vmem:[#allocation10 + $0x58] sm:$0xff]
    %v1615 = vld [vmem:[#allocation10 + $0x60] sm:$0xff]
    %v1616 = vld [vmem:[#allocation10 + $0x68] sm:$0xff]
    %v1617 = vld [vmem:[#allocation10 + $0x70] sm:$0xff]
    %v1618 = vld [vmem:[#allocation10 + $0x78] sm:$0xff]
    %v1619 = vld [vmem:[#allocation10 + $0x80] sm:$0xff]
    %v1620 = vld [vmem:[#allocation10 + $0x88] sm:$0xf]
    %s1621 = scalar_lea.vmem [#allocation10], 144
    %v1622 = vld [vmem:[%s1621] sm:$0xff]
    %v1623 = vld [vmem:[%s1621 + $0x8] sm:$0xff]
    %v1624 = vld [vmem:[%s1621 + $0x10] sm:$0xff]
    %v1625 = vld [vmem:[%s1621 + $0x18] sm:$0xff]
    %v1626 = vld [vmem:[%s1621 + $0x20] sm:$0xff]
    %v1627 = vld [vmem:[%s1621 + $0x28] sm:$0xff]
    %v1628 = vld [vmem:[%s1621 + $0x30] sm:$0xff]
    %v1629 = vld [vmem:[%s1621 + $0x38] sm:$0xff]
    %v1630 = vld [vmem:[%s1621 + $0x40] sm:$0xff]
    %v1631 = vld [vmem:[%s1621 + $0x48] sm:$0xff]
    %v1632 = vld [vmem:[%s1621 + $0x50] sm:$0xff]
    %v1633 = vld [vmem:[%s1621 + $0x58] sm:$0xff]
    %v1634 = vld [vmem:[%s1621 + $0x60] sm:$0xff]
    %v1635 = vld [vmem:[%s1621 + $0x68] sm:$0xff]
    %v1636 = vld [vmem:[%s1621 + $0x70] sm:$0xff]
    %v1637 = vld [vmem:[%s1621 + $0x78] sm:$0xff]
    %v1638 = vld [vmem:[%s1621 + $0x80] sm:$0xff]
    %v1639 = vld [vmem:[%s1621 + $0x88] sm:$0xf]
    %v1644 = vrot.slane %v1599, 2
    %v1645 = vrot.slane %v1601, 1
    %vm1646 = vcmask 1041409
    %v1647 = vsel %vm1646, %v1645, %v1644
    %v1648 = vrot.slane %v1600, 2
    %v1649 = vrot.slane %v1602, 1
    %v1650 = vsel %vm1646, %v1649, %v1648
    %vm1652 = vcmask 97280
    %v1653 = vsel %vm1652, %v1650, 0
    %v1656 = vsel %vm1370, %v1639, 0
    %1658 = vmatpush.msra.mxu0 %v1637
    %1659 = vmatpush.msra.mxu0 %v1636
    %1660 = vmatpush.msra.mxu0 %v1635
    %1661 = vmatpush.msra.mxu0 %v1634
    %1662 = vmatpush.msra.mxu0 %v1633
    %1663 = vmatpush.msra.mxu0 %v1632
    %1664 = vmatpush.msra.mxu0 %v1631
    %1665 = vmatpush.msra.mxu0 %v1630
    %1666 = vmatpush.msra.mxu0 %v1629
    %1667 = vmatpush.msra.mxu0 %v1628
    %1668 = vmatpush.msra.mxu0 %v1627
    %1669 = vmatpush.msra.mxu0 %v1626
    %1670 = vmatpush.msra.mxu0 %v1625
    %1671 = vmatpush.msra.mxu0 %v1624
    %1672 = vmatpush.msra.mxu0 %v1623
    %1673 = vmatpush.msra.mxu0 %v1622
    %1674 = vmatmul.f32.gmra.mxu0 %v1647
    %v1675 = vpop.f32.mrf.mxu0
    %v1676 = vadd.f32 0.0, %v1675
    %1677 = vdwg.mxu0
    %1678 = vmatpush.msra.mxu0 0.0
    %1679 = vmatpush.msra.mxu0 0.0
    %1680 = vmatpush.msra.mxu0 0.0
    %1681 = vmatpush.msra.mxu0 0.0
    %1682 = vmatpush.msra.mxu0 0.0
    %1683 = vmatpush.msra.mxu0 0.0
    %1684 = vmatpush.msra.mxu0 0.0
    %1685 = vmatpush.msra.mxu0 0.0
    %1686 = vmatpush.msra.mxu0 0.0
    %1687 = vmatpush.msra.mxu0 0.0
    %1688 = vmatpush.msra.mxu0 0.0
    %1689 = vmatpush.msra.mxu0 0.0
    %1690 = vmatpush.msra.mxu0 0.0
    %1691 = vmatpush.msra.mxu0 0.0
    %1692 = vmatpush.msra.mxu0 %v1656
    %1693 = vmatpush.msra.mxu0 %v1638
    %1694 = vmatmul.f32.gmra.mxu0 %v1653
    %v1695 = vpop.f32.mrf.mxu0
    %v1696 = vadd.f32 %v1676, %v1695
    %1697 = vdwg.mxu0
    %v1698 = vrot.slane %v1601, 7
    %v1699 = vsel %vm1646, %v1698, %v1599
    %v1700 = vrot.slane %v1602, 7
    %v1701 = vsel %vm1646, %v1700, %v1600
    %v1703 = vsel %vm1652, %v1701, 0
    %v1706 = vsel %vm1370, %v1620, 0
    %1708 = vmatpush.msra.mxu0 %v1618
    %1709 = vmatpush.msra.mxu0 %v1617
    %1710 = vmatpush.msra.mxu0 %v1616
    %1711 = vmatpush.msra.mxu0 %v1615
    %1712 = vmatpush.msra.mxu0 %v1614
    %1713 = vmatpush.msra.mxu0 %v1613
    %1714 = vmatpush.msra.mxu0 %v1612
    %1715 = vmatpush.msra.mxu0 %v1611
    %1716 = vmatpush.msra.mxu0 %v1610
    %1717 = vmatpush.msra.mxu0 %v1609
    %1718 = vmatpush.msra.mxu0 %v1608
    %1719 = vmatpush.msra.mxu0 %v1607
    %1720 = vmatpush.msra.mxu0 %v1606
    %1721 = vmatpush.msra.mxu0 %v1605
    %1722 = vmatpush.msra.mxu0 %v1604
    %1723 = vmatpush.msra.mxu0 %v1603
    %1724 = vmatmul.f32.gmra.mxu0 %v1699
    %v1725 = vpop.f32.mrf.mxu0
    %v1726 = vadd.f32 %v1696, %v1725
    %1727 = vdwg.mxu0
    %1728 = vmatpush.msra.mxu0 0.0
    %1729 = vmatpush.msra.mxu0 0.0
    %1730 = vmatpush.msra.mxu0 0.0
    %1731 = vmatpush.msra.mxu0 0.0
    %1732 = vmatpush.msra.mxu0 0.0
    %1733 = vmatpush.msra.mxu0 0.0
    %1734 = vmatpush.msra.mxu0 0.0
    %1735 = vmatpush.msra.mxu0 0.0
    %1736 = vmatpush.msra.mxu0 0.0
    %1737 = vmatpush.msra.mxu0 0.0
    %1738 = vmatpush.msra.mxu0 0.0
    %1739 = vmatpush.msra.mxu0 0.0
    %1740 = vmatpush.msra.mxu0 0.0
    %1741 = vmatpush.msra.mxu0 0.0
    %1742 = vmatpush.msra.mxu0 %v1706
    %1743 = vmatpush.msra.mxu0 %v1619
    %1744 = vmatmul.f32.gmra.mxu0 %v1703
    %v1745 = vpop.f32.mrf.mxu0
    %v1746 = vadd.f32 %v1726, %v1745
    %1747 = vdwg.mxu0
    %s1748 = scalar_lea.vmem [#allocation10], 288
    %v1749 = vld [vmem:[%s1748] sm:$0xff]
    %v1750 = vld [vmem:[%s1748 + $0x8] sm:$0xff]
    %v1751 = vld [vmem:[%s1748 + $0x10] sm:$0xff]
    %v1752 = vld [vmem:[%s1748 + $0x18] sm:$0xff]
    %v1753 = vld [vmem:[%s1748 + $0x20] sm:$0xff]
    %v1754 = vld [vmem:[%s1748 + $0x28] sm:$0xff]
    %v1755 = vld [vmem:[%s1748 + $0x30] sm:$0xff]
    %v1756 = vld [vmem:[%s1748 + $0x38] sm:$0xff]
    %v1757 = vld [vmem:[%s1748 + $0x40] sm:$0xff]
    %v1758 = vld [vmem:[%s1748 + $0x48] sm:$0xff]
    %v1759 = vld [vmem:[%s1748 + $0x50] sm:$0xff]
    %v1760 = vld [vmem:[%s1748 + $0x58] sm:$0xff]
    %v1761 = vld [vmem:[%s1748 + $0x60] sm:$0xff]
    %v1762 = vld [vmem:[%s1748 + $0x68] sm:$0xff]
    %v1763 = vld [vmem:[%s1748 + $0x70] sm:$0xff]
    %v1764 = vld [vmem:[%s1748 + $0x78] sm:$0xff]
    %v1765 = vld [vmem:[%s1748 + $0x80] sm:$0xff]
    %v1766 = vld [vmem:[%s1748 + $0x88] sm:$0xf]
    %v1767 = vrot.slane %v1599, 4
    %v1768 = vrot.slane %v1601, 3
    %v1769 = vsel %vm1646, %v1768, %v1767
    %v1770 = vrot.slane %v1600, 4
    %v1771 = vrot.slane %v1602, 3
    %v1772 = vsel %vm1646, %v1771, %v1770
    %v1774 = vsel %vm1652, %v1772, 0
    %v1777 = vsel %vm1370, %v1766, 0
    %1779 = vmatpush.msra.mxu0 %v1764
    %1780 = vmatpush.msra.mxu0 %v1763
    %1781 = vmatpush.msra.mxu0 %v1762
    %1782 = vmatpush.msra.mxu0 %v1761
    %1783 = vmatpush.msra.mxu0 %v1760
    %1784 = vmatpush.msra.mxu0 %v1759
    %1785 = vmatpush.msra.mxu0 %v1758
    %1786 = vmatpush.msra.mxu0 %v1757
    %1787 = vmatpush.msra.mxu0 %v1756
    %1788 = vmatpush.msra.mxu0 %v1755
    %1789 = vmatpush.msra.mxu0 %v1754
    %1790 = vmatpush.msra.mxu0 %v1753
    %1791 = vmatpush.msra.mxu0 %v1752
    %1792 = vmatpush.msra.mxu0 %v1751
    %1793 = vmatpush.msra.mxu0 %v1750
    %1794 = vmatpush.msra.mxu0 %v1749
    %1795 = vmatmul.f32.gmra.mxu0 %v1769
    %v1796 = vpop.f32.mrf.mxu0
    %v1797 = vadd.f32 0.0, %v1796
    %1798 = vdwg.mxu0
    %1799 = vmatpush.msra.mxu0 0.0
    %1800 = vmatpush.msra.mxu0 0.0
    %1801 = vmatpush.msra.mxu0 0.0
    %1802 = vmatpush.msra.mxu0 0.0
    %1803 = vmatpush.msra.mxu0 0.0
    %1804 = vmatpush.msra.mxu0 0.0
    %1805 = vmatpush.msra.mxu0 0.0
    %1806 = vmatpush.msra.mxu0 0.0
    %1807 = vmatpush.msra.mxu0 0.0
    %1808 = vmatpush.msra.mxu0 0.0
    %1809 = vmatpush.msra.mxu0 0.0
    %1810 = vmatpush.msra.mxu0 0.0
    %1811 = vmatpush.msra.mxu0 0.0
    %1812 = vmatpush.msra.mxu0 0.0
    %1813 = vmatpush.msra.mxu0 %v1777
    %1814 = vmatpush.msra.mxu0 %v1765
    %1815 = vmatmul.f32.gmra.mxu0 %v1774
    %v1816 = vpop.f32.mrf.mxu0
    %v1817 = vadd.f32 %v1797, %v1816
    %1818 = vdwg.mxu0
    %v1819 = vadd.f32 %v1746, %v1817
    %s1820 = scalar_lea.vmem [#allocation10], 432
    %v1821 = vld [vmem:[%s1820] sm:$0xff]
    %v1822 = vld [vmem:[%s1820 + $0x8] sm:$0xff]
    %v1823 = vld [vmem:[%s1820 + $0x10] sm:$0xff]
    %v1824 = vld [vmem:[%s1820 + $0x18] sm:$0xff]
    %v1825 = vld [vmem:[%s1820 + $0x20] sm:$0xff]
    %v1826 = vld [vmem:[%s1820 + $0x28] sm:$0xff]
    %v1827 = vld [vmem:[%s1820 + $0x30] sm:$0xff]
    %v1828 = vld [vmem:[%s1820 + $0x38] sm:$0xff]
    %v1829 = vld [vmem:[%s1820 + $0x40] sm:$0xff]
    %v1830 = vld [vmem:[%s1820 + $0x48] sm:$0xff]
    %v1831 = vld [vmem:[%s1820 + $0x50] sm:$0xff]
    %v1832 = vld [vmem:[%s1820 + $0x58] sm:$0xff]
    %v1833 = vld [vmem:[%s1820 + $0x60] sm:$0xff]
    %v1834 = vld [vmem:[%s1820 + $0x68] sm:$0xff]
    %v1835 = vld [vmem:[%s1820 + $0x70] sm:$0xff]
    %v1836 = vld [vmem:[%s1820 + $0x78] sm:$0xff]
    %v1837 = vld [vmem:[%s1820 + $0x80] sm:$0xff]
    %v1838 = vld [vmem:[%s1820 + $0x88] sm:$0xf]
    %v1839 = vrot.slane %v1599, 6
    %v1840 = vrot.slane %v1601, 5
    %v1841 = vsel %vm1646, %v1840, %v1839
    %v1842 = vrot.slane %v1600, 6
    %v1843 = vrot.slane %v1602, 5
    %v1844 = vsel %vm1646, %v1843, %v1842
    %v1846 = vsel %vm1652, %v1844, 0
    %v1849 = vsel %vm1370, %v1838, 0
    %1851 = vmatpush.msra.mxu0 %v1836
    %1852 = vmatpush.msra.mxu0 %v1835
    %1853 = vmatpush.msra.mxu0 %v1834
    %1854 = vmatpush.msra.mxu0 %v1833
    %1855 = vmatpush.msra.mxu0 %v1832
    %1856 = vmatpush.msra.mxu0 %v1831
    %1857 = vmatpush.msra.mxu0 %v1830
    %1858 = vmatpush.msra.mxu0 %v1829
    %1859 = vmatpush.msra.mxu0 %v1828
    %1860 = vmatpush.msra.mxu0 %v1827
    %1861 = vmatpush.msra.mxu0 %v1826
    %1862 = vmatpush.msra.mxu0 %v1825
    %1863 = vmatpush.msra.mxu0 %v1824
    %1864 = vmatpush.msra.mxu0 %v1823
    %1865 = vmatpush.msra.mxu0 %v1822
    %1866 = vmatpush.msra.mxu0 %v1821
    %1867 = vmatmul.f32.gmra.mxu0 %v1841
    %v1868 = vpop.f32.mrf.mxu0
    %v1869 = vadd.f32 0.0, %v1868
    %1870 = vdwg.mxu0
    %1871 = vmatpush.msra.mxu0 0.0
    %1872 = vmatpush.msra.mxu0 0.0
    %1873 = vmatpush.msra.mxu0 0.0
    %1874 = vmatpush.msra.mxu0 0.0
    %1875 = vmatpush.msra.mxu0 0.0
    %1876 = vmatpush.msra.mxu0 0.0
    %1877 = vmatpush.msra.mxu0 0.0
    %1878 = vmatpush.msra.mxu0 0.0
    %1879 = vmatpush.msra.mxu0 0.0
    %1880 = vmatpush.msra.mxu0 0.0
    %1881 = vmatpush.msra.mxu0 0.0
    %1882 = vmatpush.msra.mxu0 0.0
    %1883 = vmatpush.msra.mxu0 0.0
    %1884 = vmatpush.msra.mxu0 0.0
    %1885 = vmatpush.msra.mxu0 %v1849
    %1886 = vmatpush.msra.mxu0 %v1837
    %1887 = vmatmul.f32.gmra.mxu0 %v1846
    %v1888 = vpop.f32.mrf.mxu0
    %v1889 = vadd.f32 %v1869, %v1888
    %1890 = vdwg.mxu0
    %v1891 = vadd.f32 %v1819, %v1889
    %v1892 = vld [vmem:[#allocation11] sm:$0x1]
    %v1894 = vperm.slane %v1892, 0
    %v1896 = vadd.f32 %v1891, %v1894
    %v1897 = vmax.f32 %v1896, 0.0
    %v1898 = vld [vmem:[#allocation13] sm:$0xff]
    %v1899 = vld [vmem:[#allocation13 + $0x8] sm:$0xff]
    %v1900 = vld [vmem:[#allocation13 + $0x10] sm:$0xff]
    %v1901 = vld [vmem:[#allocation13 + $0x18] sm:$0xff]
    %v1902 = vld [vmem:[#allocation13 + $0x20] sm:$0xff]
    %v1903 = vld [vmem:[#allocation13 + $0x28] sm:$0xff]
    %v1904 = vld [vmem:[#allocation13 + $0x30] sm:$0xff]
    %v1905 = vld [vmem:[#allocation13 + $0x38] sm:$0xff]
    %v1906 = vld [vmem:[#allocation13 + $0x40] sm:$0xff]
    %v1907 = vld [vmem:[#allocation13 + $0x48] sm:$0xff]
    %v1908 = vld [vmem:[#allocation13 + $0x50] sm:$0xff]
    %v1909 = vld [vmem:[#allocation13 + $0x58] sm:$0xff]
    %v1910 = vld [vmem:[#allocation13 + $0x60] sm:$0xff]
    %v1911 = vld [vmem:[#allocation13 + $0x68] sm:$0xff]
    %v1912 = vld [vmem:[#allocation13 + $0x70] sm:$0xff]
    %v1913 = vld [vmem:[#allocation13 + $0x78] sm:$0xff]
    %v1914 = vld [vmem:[#allocation14] sm:$0x1]
    %v1916 = vperm.slane %v1914, 0
    %1918 = vmatpush.msra.mxu0 %v1913
    %1919 = vmatpush.msra.mxu0 %v1912
    %1920 = vmatpush.msra.mxu0 %v1911
    %1921 = vmatpush.msra.mxu0 %v1910
    %1922 = vmatpush.msra.mxu0 %v1909
    %1923 = vmatpush.msra.mxu0 %v1908
    %1924 = vmatpush.msra.mxu0 %v1907
    %1925 = vmatpush.msra.mxu0 %v1906
    %1926 = vmatpush.msra.mxu0 %v1905
    %1927 = vmatpush.msra.mxu0 %v1904
    %1928 = vmatpush.msra.mxu0 %v1903
    %1929 = vmatpush.msra.mxu0 %v1902
    %1930 = vmatpush.msra.mxu0 %v1901
    %1931 = vmatpush.msra.mxu0 %v1900
    %1932 = vmatpush.msra.mxu0 %v1899
    %1933 = vmatpush.msra.mxu0 %v1898
    %1934 = vmatmul.f32.gmra.mxu0 %v1897
    %v1935 = vpop.f32.mrf.mxu0
    %v1936 = vadd.f32 %v1916, %v1935
    %1937 = vdwg.mxu0
    %vm1938 = vcmask 74752
    %v1939 = vsel %vm1938, %v1936, -inf
    %1940 = vmax.xlane.f32.xlu0 %v1939
    %v1941 = vpop.xlane.xlu0 %1940
    %v1942 = vsub.f32 %v1936, %v1941
    %v1943 = vmul.f32 %v1942, 1.442695
    %v1944 = vpow.pop %v1943
    %v1945 = vsel %vm1938, %v1944, 0.0
    %1946 = vadd.xlane.f32.xlu0 %v1945
    %v1947 = vpop.xlane.xlu0 %1946
    %v1948 = vlog2.pop %v1947
    %v1949 = vmul.f32 %v1948, 0.6931472
    %v1950 = vadd.f32 %v1941, %v1949
    %v1951 = vsub.f32 %v1936, %v1950
    %1952 = vst.msk [vmem:[#allocation16] sm:$0x3] %vm1938, %v1951
    // Predicated region
    $region70: #{net_forward.1} parent=1 // pred_check
      _
    $region71: #{net_forward.1} parent=1 // pred_check_branch
      %1954 = sbr.rel (0) target = $region73
    $region72: #{net_forward.1} parent=1 // pred_region
      %1956 = vsyncadd [#allocation4], 0
      %s1958 = sshll.u32 [#allocation16], 4
      %s1959 = int_to_ptr.vmem [resolvable:$true] %s1958
      %s1960 = sshll.u32 %s9, 4
      %s1961 = int_to_ptr.hbm [resolvable:$true] %s1960
      %1963 = dma.vmem_to_hbm [thread:$0]  %s1959, 32, %s1961, [#allocation4]
    $region73: #{net_forward.1} parent=1 // pred_fallthru
      _
    // Predicated region
    $region74: #{net_forward.1} parent=1 // pred_check
      _
    $region75: #{net_forward.1} parent=1 // pred_check_branch
      %1965 = sbr.rel (0) target = $region77
    $region76: #{net_forward.1} parent=1 // pred_region
      %1967 = dma.done [#allocation4], 32
    $region77: #{net_forward.1} parent=1 // pred_fallthru
      _
    %1968 = vsyncpa [#allocation3], 1
    %1969 = vsyncpa [#allocation6], 1
    %1970 = vsyncpa [#allocation9], 1
    %1971 = vsyncpa [#allocation12], 1
    %1972 = vsyncpa [#allocation15], 1
    %1973 = vsyncpa [#allocation4], 1

</llo_original>
